<compile_context>
chip_gen: v5e
topology: v5e:2x2
jax: 0.10.0
libtpu: 0.0.40
codegen_flags: <defaults>
</compile_context>

<pallas_src>
import functools
import math

import jax
import jax.numpy as jnp
from jax.experimental import pallas as pl
from jax.experimental.pallas import tpu as pltpu


def transformer_block_kernel(
    v_ref, k_ref, q_ref, m_ref,
    wv_ref, wk_ref, wq_ref, wo_ref, bo_ref,
    w1_ref, b1_ref, w2_ref, b2_ref, gamma_ref, beta_ref,
    o_ref,
    *, heads, head_dim, embed_size, eps, compute_dtype,
):
    cd = compute_dtype

    v = v_ref[0]          # (S, E)   compute dtype
    k = k_ref[0]          # (S, E)
    q = q_ref[0]          # (Tq, E)
    m = m_ref[0]          # (Tq, S)

    S = v.shape[0]
    Tq = q.shape[0]

    # --- V/K/Q projections: one full-width matmul each (block-diagonal weights,
    #     already transposed — and, for Q, pre-scaled by 1/sqrt(E) — in the wrapper)
    vp = jnp.dot(v, wv_ref[...], preferred_element_type=jnp.float32)   # (S, E)  f32
    kp = jnp.dot(k, wk_ref[...], preferred_element_type=jnp.float32)   # (S, E)  f32
    qp = jnp.dot(q, wq_ref[...], preferred_element_type=jnp.float32)   # (Tq, E) f32

    # --- split heads once into a (heads, len, hd) batched layout ----------------
    vh = jnp.transpose(vp.reshape(S, heads, head_dim), (1, 0, 2)).astype(cd)
    kh = jnp.transpose(kp.reshape(S, heads, head_dim), (1, 0, 2)).astype(cd)
    qh = jnp.transpose(qp.reshape(Tq, heads, head_dim), (1, 0, 2)).astype(cd)

    # --- batched attention scores (single einsum over all heads) ----------------
    # scale already folded into wq -> energy is the pre-softmax logits directly.
    energy = jnp.einsum("hqd,hkd->hqk", qh, kh,
                        preferred_element_type=jnp.float32)            # (h, Tq, S)
    s = jnp.where(m[None, :, :] == 0, jnp.float32(-1e20), energy)

    # --- softmax over keys: f32 stats, EUP approx reciprocal --------------------
    mx = jnp.max(s, axis=-1, keepdims=True)
    e = jnp.exp(s - mx)
    denom = jnp.sum(e, axis=-1, keepdims=True)
    attn = e * pl.reciprocal(denom, approx=True)                       # (h, Tq, S)

    ctx = jnp.einsum("hqk,hkd->hqd", attn.astype(cd), vh,
                     preferred_element_type=jnp.float32)               # (h, Tq, hd)
    ctx = jnp.transpose(ctx, (1, 0, 2)).reshape(Tq, embed_size)        # (Tq, E)

    # --- fc_out projection -------------------------------------------------------
    attn_out = jnp.dot(ctx.astype(cd), wo_ref[...],
                       preferred_element_type=jnp.float32) + bo_ref[...]   # (Tq, E) f32

    # --- feedforward + residual + LayerNorm (f32 statistics) --------------------
    h1 = jnp.maximum(
        jnp.dot(attn_out.astype(cd), w1_ref[...],
                preferred_element_type=jnp.float32) + b1_ref[...], 0.0)    # (Tq, Hf)
    h2 = jnp.dot(h1.astype(cd), w2_ref[...],
                 preferred_element_type=jnp.float32) + b2_ref[...]         # (Tq, E)
    res = h2 + attn_out
    mean = jnp.mean(res, axis=-1, keepdims=True)
    var = jnp.mean((res - mean) ** 2, axis=-1, keepdims=True)
    normed = (res - mean) * jax.lax.rsqrt(var + eps)
    out = normed * gamma_ref[...] + beta_ref[...]

    # TODO(synk): nn.Dropout is identity in eval mode; train-mode RNG dropout not implemented.
    o_ref[0] = out.astype(o_ref.dtype)


def transformer_block(value, key, query, mask, params, *, heads,
                      compute_dtype=jnp.float32, q_tile=128):
    N, S, E = query.shape
    head_dim = E // heads
    Hf = params["w1"].shape[0]

    tq = min(q_tile, S)
    assert S % tq == 0, "sequence length must be divisible by the query tile"
    num_q = S // tq

    cd = compute_dtype

    # Wrapper-side weight prep (tiny, constant-size work done once per call):
    #  * block-diagonal (E, E) projection weights: x @ kron(I_heads, w.T) applies the
    #    shared per-head Linear to every head in a single matmul.
    #  * all weights pre-transposed so the kernel never does `.T`.
    #  * the softmax 1/sqrt(E) scale is folded into the Q weight (frees a full
    #    (heads, Tq, S) multiply per grid step in the kernel).
    #  * matmul operands (activations + weights) cast to compute_dtype (bf16 halves
    #    DMA bytes and VMEM footprint); biases / LN params stay f32.
    eye = jnp.eye(heads, dtype=jnp.float32)
    scale = jnp.float32(1.0 / math.sqrt(E))
    wv_bd = jnp.kron(eye, params["wv"].T).astype(cd)              # (E, E)
    wk_bd = jnp.kron(eye, params["wk"].T).astype(cd)              # (E, E)
    wq_bd = (jnp.kron(eye, params["wq"].T) * scale).astype(cd)    # (E, E), pre-scaled
    wo_t = params["wo"].T.astype(cd)                              # (E, E)
    w1_t = params["w1"].T.astype(cd)                              # (E, Hf)
    w2_t = params["w2"].T.astype(cd)                              # (Hf, E)

    value = value.astype(cd)
    key = key.astype(cd)
    query = query.astype(cd)
    mask = mask.astype(cd)   # only mask == 0 matters; cast shrinks DMA in bf16 mode

    def rep2d(shape):
        return pl.BlockSpec(shape, lambda b, qi: (0, 0))

    in_specs = [
        pl.BlockSpec((1, S, E), lambda b, qi: (b, 0, 0)),     # value (full keys)
        pl.BlockSpec((1, S, E), lambda b, qi: (b, 0, 0)),     # key   (full keys)
        pl.BlockSpec((1, tq, E), lambda b, qi: (b, qi, 0)),   # query (tiled)
        pl.BlockSpec((1, tq, S), lambda b, qi: (b, qi, 0)),   # mask  (tiled rows)
        rep2d((E, E)), rep2d((E, E)), rep2d((E, E)),          # wv/wk/wq block-diag
        rep2d((E, E)), rep2d((1, E)),                         # wo_t, bo
        rep2d((E, Hf)), rep2d((1, Hf)),                       # w1_t, b1
        rep2d((Hf, E)), rep2d((1, E)),                        # w2_t, b2
        rep2d((1, E)), rep2d((1, E)),                         # gamma, beta
    ]
    out_specs = pl.BlockSpec((1, tq, E), lambda b, qi: (b, qi, 0))

    kernel = functools.partial(
        transformer_block_kernel,
        heads=heads, head_dim=head_dim, embed_size=E, eps=1e-5,
        compute_dtype=cd,
    )

    return pl.pallas_call(
        kernel,
        out_shape=jax.ShapeDtypeStruct((N, S, E), jnp.float32),
        grid=(N, num_q),
        in_specs=in_specs,
        out_specs=out_specs,
        compiler_params=pltpu.CompilerParams(
            # batch and query-tile steps are fully independent -> megacore on v7x
            dimension_semantics=("parallel", "parallel"),
            vmem_limit_bytes=64 * 1024 * 1024),
    )(value, key, query, mask,
      wv_bd, wk_bd, wq_bd, wo_t, params["bo"],
      w1_t, params["b1"], w2_t, params["b2"],
      params["gamma"], params["beta"])


def transformer_block_ref(value, key, query, mask, params, *, heads):
    """Pure-JAX reference mirroring the PyTorch forward (eval mode)."""
    N, S, E = query.shape
    hd = E // heads

    def split(x):
        return x.reshape(N, S, heads, hd)

    v = jnp.einsum("nshd,ed->nshe", split(value), params["wv"])
    k = jnp.einsum("nshd,ed->nshe", split(key), params["wk"])
    q = jnp.einsum("nshd,ed->nshe", split(query), params["wq"])
    energy = jnp.einsum("nqhd,nkhd->nhqk", q, k)
    energy = jnp.where(mask[:, None, :, :] == 0, -1e20, energy)
    attn = jax.nn.softmax(energy / math.sqrt(E), axis=3)
    out = jnp.einsum("nhqk,nkhd->nqhd", attn, v).reshape(N, S, E)
    out = out @ params["wo"].T + params["bo"][0]

    h1 = jnp.maximum(out @ params["w1"].T + params["b1"][0], 0.0)
    h2 = h1 @ params["w2"].T + params["b2"][0]
    res = h2 + out
    mean = jnp.mean(res, axis=-1, keepdims=True)
    var = jnp.mean((res - mean) ** 2, axis=-1, keepdims=True)
    normed = (res - mean) / jnp.sqrt(var + 1e-5)
    return normed * params["gamma"][0] + params["beta"][0]


if __name__ == "__main__":
    N, S, E, heads, Hf = 2, 8, 32, 4, 64
    hd = E // heads

    root = jax.random.PRNGKey(0)
    k_in, k_par = jax.random.split(root)
    kv, kk, kq = jax.random.split(k_in, 3)
    value = jax.random.normal(kv, (N, S, E), jnp.float32)
    key = jax.random.normal(kk, (N, S, E), jnp.float32)
    query = jax.random.normal(kq, (N, S, E), jnp.float32)
    # causal mask, 1 = keep, 0 = masked (broadcast over heads)
    mask = jnp.tril(jnp.ones((S, S), jnp.float32))[None].repeat(N, axis=0)

    ks = jax.random.split(k_par, 9)
    params = {
        "wv": 0.1 * jax.random.normal(ks[0], (hd, hd), jnp.float32),
        "wk": 0.1 * jax.random.normal(ks[1], (hd, hd), jnp.float32),
        "wq": 0.1 * jax.random.normal(ks[2], (hd, hd), jnp.float32),
        "wo": 0.1 * jax.random.normal(ks[3], (E, E), jnp.float32),
        "bo": 0.1 * jax.random.normal(ks[4], (1, E), jnp.float32),
        "w1": 0.1 * jax.random.normal(ks[5], (Hf, E), jnp.float32),
        "b1": 0.1 * jax.random.normal(ks[6], (1, Hf), jnp.float32),
        "w2": 0.1 * jax.random.normal(ks[7], (E, Hf), jnp.float32),
        "b2": 0.1 * jax.random.normal(ks[8], (1, E), jnp.float32),
        "gamma": jnp.ones((1, E), jnp.float32),
        "beta": jnp.zeros((1, E), jnp.float32),
    }

    ref = transformer_block_ref(value, key, query, mask, params, heads=heads)

    # f32 compute path (tight check; approx-reciprocal softmax ~1e-3 level)
    out_f32 = transformer_block(value, key, query, mask, params, heads=heads,
                                compute_dtype=jnp.float32)
    out_f32 = jax.block_until_ready(out_f32)
    assert out_f32.shape == (N, S, E)
    assert jnp.allclose(out_f32, ref, rtol=5e-3, atol=5e-3), "f32 kernel mismatch vs reference"

    # bf16 MXU-operand path (f32 accumulation / stats) — looser tolerance
    out_bf16 = transformer_block(value, key, query, mask, params, heads=heads,
                                 compute_dtype=jnp.bfloat16)
    out_bf16 = jax.block_until_ready(out_bf16)
    assert jnp.allclose(out_bf16, ref, rtol=7.5e-2, atol=7.5e-2), "bf16 kernel mismatch vs reference"

    print("KERNEL_OK")
</pallas_src>

<mosaic_0001>
module attributes {stable_mosaic.version = 11 : i64} {
  func.func @transformer_block_kernel(%arg0: i32, %arg1: i32, %arg2: memref<1x8x32xf32, #tpu.memory_space<vmem>>, %arg3: memref<1x8x32xf32, #tpu.memory_space<vmem>>, %arg4: memref<1x8x32xf32, #tpu.memory_space<vmem>>, %arg5: memref<1x8x8xf32, #tpu.memory_space<vmem>>, %arg6: memref<32x32xf32, #tpu.memory_space<vmem>>, %arg7: memref<32x32xf32, #tpu.memory_space<vmem>>, %arg8: memref<32x32xf32, #tpu.memory_space<vmem>>, %arg9: memref<32x32xf32, #tpu.memory_space<vmem>>, %arg10: memref<1x32xf32, #tpu.memory_space<vmem>>, %arg11: memref<32x64xf32, #tpu.memory_space<vmem>>, %arg12: memref<1x64xf32, #tpu.memory_space<vmem>>, %arg13: memref<64x32xf32, #tpu.memory_space<vmem>>, %arg14: memref<1x32xf32, #tpu.memory_space<vmem>>, %arg15: memref<1x32xf32, #tpu.memory_space<vmem>>, %arg16: memref<1x32xf32, #tpu.memory_space<vmem>>, %arg17: memref<1x8x32xf32, #tpu.memory_space<vmem>>) attributes {dimension_semantics = [#tpu.dimension_semantics<parallel>, #tpu.dimension_semantics<parallel>], iteration_bounds = array<i64: 2, 1>, scalar_prefetch = 0 : i64, scratch_operands = 0 : i64, tpu.core_type = #tpu.core_type<tc>, window_params = [{transform_indices = @transform_0, window_bounds = array<i64: 1, 8, 32>}, {transform_indices = @transform_1, window_bounds = array<i64: 1, 8, 32>}, {transform_indices = @transform_2, window_bounds = array<i64: 1, 8, 32>}, {transform_indices = @transform_3, window_bounds = array<i64: 1, 8, 8>}, {pipeline_mode = #tpu.pipeline_mode<synchronous>, transform_indices = @transform_4, window_bounds = array<i64: 32, 32>}, {pipeline_mode = #tpu.pipeline_mode<synchronous>, transform_indices = @transform_5, window_bounds = array<i64: 32, 32>}, {pipeline_mode = #tpu.pipeline_mode<synchronous>, transform_indices = @transform_6, window_bounds = array<i64: 32, 32>}, {pipeline_mode = #tpu.pipeline_mode<synchronous>, transform_indices = @transform_7, window_bounds = array<i64: 32, 32>}, {pipeline_mode = #tpu.pipeline_mode<synchronous>, transform_indices = @transform_8, window_bounds = array<i64: 1, 32>}, {pipeline_mode = #tpu.pipeline_mode<synchronous>, transform_indices = @transform_9, window_bounds = array<i64: 32, 64>}, {pipeline_mode = #tpu.pipeline_mode<synchronous>, transform_indices = @transform_10, window_bounds = array<i64: 1, 64>}, {pipeline_mode = #tpu.pipeline_mode<synchronous>, transform_indices = @transform_11, window_bounds = array<i64: 64, 32>}, {pipeline_mode = #tpu.pipeline_mode<synchronous>, transform_indices = @transform_12, window_bounds = array<i64: 1, 32>}, {pipeline_mode = #tpu.pipeline_mode<synchronous>, transform_indices = @transform_13, window_bounds = array<i64: 1, 32>}, {pipeline_mode = #tpu.pipeline_mode<synchronous>, transform_indices = @transform_14, window_bounds = array<i64: 1, 32>}, {transform_indices = @transform_15, window_bounds = array<i64: 1, 8, 32>}]} {
    %c0 = arith.constant 0 : index
    %c0_0 = arith.constant 0 : index
    %c0_1 = arith.constant 0 : index
    %0 = vector.load %arg2[%c0, %c0_0, %c0_1] : memref<1x8x32xf32, #tpu.memory_space<vmem>>, vector<1x8x32xf32>
    %1 = vector.shape_cast %0 : vector<1x8x32xf32> to vector<8x32xf32>
    %c0_2 = arith.constant 0 : index
    %c0_3 = arith.constant 0 : index
    %c0_4 = arith.constant 0 : index
    %2 = vector.load %arg3[%c0_2, %c0_3, %c0_4] : memref<1x8x32xf32, #tpu.memory_space<vmem>>, vector<1x8x32xf32>
    %3 = vector.shape_cast %2 : vector<1x8x32xf32> to vector<8x32xf32>
    %c0_5 = arith.constant 0 : index
    %c0_6 = arith.constant 0 : index
    %c0_7 = arith.constant 0 : index
    %4 = vector.load %arg4[%c0_5, %c0_6, %c0_7] : memref<1x8x32xf32, #tpu.memory_space<vmem>>, vector<1x8x32xf32>
    %5 = vector.shape_cast %4 : vector<1x8x32xf32> to vector<8x32xf32>
    %c0_8 = arith.constant 0 : index
    %c0_9 = arith.constant 0 : index
    %c0_10 = arith.constant 0 : index
    %6 = vector.load %arg5[%c0_8, %c0_9, %c0_10] : memref<1x8x8xf32, #tpu.memory_space<vmem>>, vector<1x8x8xf32>
    %7 = vector.shape_cast %6 : vector<1x8x8xf32> to vector<8x8xf32>
    %c0_11 = arith.constant 0 : index
    %c0_12 = arith.constant 0 : index
    %8 = vector.load %arg6[%c0_11, %c0_12] : memref<32x32xf32, #tpu.memory_space<vmem>>, vector<32x32xf32>
    %cst = arith.constant dense<0.000000e+00> : vector<8x32xf32>
    %9 = tpu.matmul %1, %8, %cst {dimension_numbers = #tpu.dot_dimension_numbers<[1], [0], [0], [1], [0, 0, 1, 1], [], []>} : vector<8x32xf32>, vector<32x32xf32>, vector<8x32xf32> -> vector<8x32xf32>
    %c0_13 = arith.constant 0 : index
    %c0_14 = arith.constant 0 : index
    %10 = vector.load %arg7[%c0_13, %c0_14] : memref<32x32xf32, #tpu.memory_space<vmem>>, vector<32x32xf32>
    %cst_15 = arith.constant dense<0.000000e+00> : vector<8x32xf32>
    %11 = tpu.matmul %3, %10, %cst_15 {dimension_numbers = #tpu.dot_dimension_numbers<[1], [0], [0], [1], [0, 0, 1, 1], [], []>} : vector<8x32xf32>, vector<32x32xf32>, vector<8x32xf32> -> vector<8x32xf32>
    %c0_16 = arith.constant 0 : index
    %c0_17 = arith.constant 0 : index
    %12 = vector.load %arg8[%c0_16, %c0_17] : memref<32x32xf32, #tpu.memory_space<vmem>>, vector<32x32xf32>
    %cst_18 = arith.constant dense<0.000000e+00> : vector<8x32xf32>
    %13 = tpu.matmul %5, %12, %cst_18 {dimension_numbers = #tpu.dot_dimension_numbers<[1], [0], [0], [1], [0, 0, 1, 1], [], []>} : vector<8x32xf32>, vector<32x32xf32>, vector<8x32xf32> -> vector<8x32xf32>
    %14 = vector.shape_cast %9 : vector<8x32xf32> to vector<8x4x8xf32>
    %15 = tpu.transpose %14, [1, 0, 2] : vector<8x4x8xf32> -> vector<4x8x8xf32>
    %16 = vector.shape_cast %11 : vector<8x32xf32> to vector<8x4x8xf32>
    %17 = tpu.transpose %16, [1, 0, 2] : vector<8x4x8xf32> -> vector<4x8x8xf32>
    %18 = vector.shape_cast %13 : vector<8x32xf32> to vector<8x4x8xf32>
    %19 = tpu.transpose %18, [1, 0, 2] : vector<8x4x8xf32> -> vector<4x8x8xf32>
    "tpu.trace_start"() <{level = 10 : i32, message = "hqd,hkd->hqk"}> : () -> ()
    %cst_19 = arith.constant dense<0.000000e+00> : vector<4x8x8xf32>
    %20 = tpu.matmul %19, %17, %cst_19 {dimension_numbers = #tpu.dot_dimension_numbers<[2], [2], [1], [1], [0, 0, 0, 1, 1, 1], [0], [0]>} : vector<4x8x8xf32>, vector<4x8x8xf32>, vector<4x8x8xf32> -> vector<4x8x8xf32>
    "tpu.trace_stop"() : () -> ()
    %21 = vector.shape_cast %7 : vector<8x8xf32> to vector<1x8x8xf32>
    %cst_20 = arith.constant 0.000000e+00 : f32
    %22 = vector.broadcast %cst_20 : f32 to vector<1x8x8xf32>
    %23 = arith.cmpf oeq, %21, %22 : vector<1x8x8xf32>
    %cst_21 = arith.constant -1.000000e+20 : f32
    %24 = vector.shape_cast %23 : vector<1x8x8xi1> to vector<1x8x8xi1>
    %25 = vector.broadcast %24 : vector<1x8x8xi1> to vector<4x8x8xi1>
    %26 = vector.broadcast %cst_21 : f32 to vector<4x8x8xf32>
    %27 = arith.select %25, %26, %20 : vector<4x8x8xi1>, vector<4x8x8xf32>
    %cst_22 = arith.constant dense<0xFF800000> : vector<4x8xf32>
    %28 = vector.multi_reduction <maximumf>, %27, %cst_22 [2] : vector<4x8x8xf32> to vector<4x8xf32>
    %29 = vector.shape_cast %28 : vector<4x8xf32> to vector<4x8x1xf32>
    %30 = vector.broadcast %29 : vector<4x8x1xf32> to vector<4x8x8xf32>
    %31 = arith.subf %27, %30 : vector<4x8x8xf32>
    %32 = math.exp %31 : vector<4x8x8xf32>
    %cst_23 = arith.constant dense<0.000000e+00> : vector<4x8xf32>
    %33 = vector.multi_reduction <add>, %32, %cst_23 [2] : vector<4x8x8xf32> to vector<4x8xf32>
    %34 = vector.shape_cast %33 : vector<4x8xf32> to vector<4x8x1xf32>
    %35 = tpu.reciprocal %34 {approx = true} : vector<4x8x1xf32> -> vector<4x8x1xf32>
    %36 = vector.broadcast %35 : vector<4x8x1xf32> to vector<4x8x8xf32>
    %37 = arith.mulf %32, %36 : vector<4x8x8xf32>
    "tpu.trace_start"() <{level = 10 : i32, message = "hqk,hkd->hqd"}> : () -> ()
    %cst_24 = arith.constant dense<0.000000e+00> : vector<4x8x8xf32>
    %38 = tpu.matmul %37, %15, %cst_24 {dimension_numbers = #tpu.dot_dimension_numbers<[2], [1], [1], [2], [0, 0, 0, 1, 1, 2], [0], [0]>} : vector<4x8x8xf32>, vector<4x8x8xf32>, vector<4x8x8xf32> -> vector<4x8x8xf32>
    "tpu.trace_stop"() : () -> ()
    %39 = tpu.transpose %38, [1, 0, 2] : vector<4x8x8xf32> -> vector<8x4x8xf32>
    %40 = vector.shape_cast %39 : vector<8x4x8xf32> to vector<8x32xf32>
    %c0_25 = arith.constant 0 : index
    %c0_26 = arith.constant 0 : index
    %41 = vector.load %arg9[%c0_25, %c0_26] : memref<32x32xf32, #tpu.memory_space<vmem>>, vector<32x32xf32>
    %cst_27 = arith.constant dense<0.000000e+00> : vector<8x32xf32>
    %42 = tpu.matmul %40, %41, %cst_27 {dimension_numbers = #tpu.dot_dimension_numbers<[1], [0], [0], [1], [0, 0, 1, 1], [], []>} : vector<8x32xf32>, vector<32x32xf32>, vector<8x32xf32> -> vector<8x32xf32>
    %c0_28 = arith.constant 0 : index
    %c0_29 = arith.constant 0 : index
    %43 = vector.load %arg10[%c0_28, %c0_29] : memref<1x32xf32, #tpu.memory_space<vmem>>, vector<1x32xf32>
    %44 = vector.broadcast %43 : vector<1x32xf32> to vector<8x32xf32>
    %45 = arith.addf %42, %44 : vector<8x32xf32>
    %c0_30 = arith.constant 0 : index
    %c0_31 = arith.constant 0 : index
    %46 = vector.load %arg11[%c0_30, %c0_31] : memref<32x64xf32, #tpu.memory_space<vmem>>, vector<32x64xf32>
    %cst_32 = arith.constant dense<0.000000e+00> : vector<8x64xf32>
    %47 = tpu.matmul %45, %46, %cst_32 {dimension_numbers = #tpu.dot_dimension_numbers<[1], [0], [0], [1], [0, 0, 1, 1], [], []>} : vector<8x32xf32>, vector<32x64xf32>, vector<8x64xf32> -> vector<8x64xf32>
    %c0_33 = arith.constant 0 : index
    %c0_34 = arith.constant 0 : index
    %48 = vector.load %arg12[%c0_33, %c0_34] : memref<1x64xf32, #tpu.memory_space<vmem>>, vector<1x64xf32>
    %49 = vector.broadcast %48 : vector<1x64xf32> to vector<8x64xf32>
    %50 = arith.addf %47, %49 : vector<8x64xf32>
    %cst_35 = arith.constant 0.000000e+00 : f32
    %51 = vector.broadcast %cst_35 : f32 to vector<8x64xf32>
    %52 = arith.maximumf %50, %51 : vector<8x64xf32>
    %c0_36 = arith.constant 0 : index
    %c0_37 = arith.constant 0 : index
    %53 = vector.load %arg13[%c0_36, %c0_37] : memref<64x32xf32, #tpu.memory_space<vmem>>, vector<64x32xf32>
    %cst_38 = arith.constant dense<0.000000e+00> : vector<8x32xf32>
    %54 = tpu.matmul %52, %53, %cst_38 {dimension_numbers = #tpu.dot_dimension_numbers<[1], [0], [0], [1], [0, 0, 1, 1], [], []>} : vector<8x64xf32>, vector<64x32xf32>, vector<8x32xf32> -> vector<8x32xf32>
    %c0_39 = arith.constant 0 : index
    %c0_40 = arith.constant 0 : index
    %55 = vector.load %arg14[%c0_39, %c0_40] : memref<1x32xf32, #tpu.memory_space<vmem>>, vector<1x32xf32>
    %56 = vector.broadcast %55 : vector<1x32xf32> to vector<8x32xf32>
    %57 = arith.addf %54, %56 : vector<8x32xf32>
    %58 = arith.addf %57, %45 : vector<8x32xf32>
    %cst_41 = arith.constant dense<0.000000e+00> : vector<8xf32>
    %59 = vector.multi_reduction <add>, %58, %cst_41 [1] : vector<8x32xf32> to vector<8xf32>
    %60 = vector.shape_cast %59 : vector<8xf32> to vector<8x1xf32>
    %cst_42 = arith.constant 3.200000e+01 : f32
    %61 = vector.broadcast %cst_42 : f32 to vector<8x1xf32>
    %62 = arith.divf %60, %61 : vector<8x1xf32>
    %63 = vector.broadcast %62 : vector<8x1xf32> to vector<8x32xf32>
    %64 = arith.subf %58, %63 : vector<8x32xf32>
    %65 = arith.mulf %64, %64 : vector<8x32xf32>
    %cst_43 = arith.constant dense<0.000000e+00> : vector<8xf32>
    %66 = vector.multi_reduction <add>, %65, %cst_43 [1] : vector<8x32xf32> to vector<8xf32>
    %67 = vector.shape_cast %66 : vector<8xf32> to vector<8x1xf32>
    %cst_44 = arith.constant 3.200000e+01 : f32
    %68 = vector.broadcast %cst_44 : f32 to vector<8x1xf32>
    %69 = arith.divf %67, %68 : vector<8x1xf32>
    %70 = vector.broadcast %62 : vector<8x1xf32> to vector<8x32xf32>
    %71 = arith.subf %58, %70 : vector<8x32xf32>
    %cst_45 = arith.constant 9.99999974E-6 : f32
    %72 = vector.broadcast %cst_45 : f32 to vector<8x1xf32>
    %73 = arith.addf %69, %72 : vector<8x1xf32>
    %74 = math.rsqrt %73 : vector<8x1xf32>
    %75 = vector.broadcast %74 : vector<8x1xf32> to vector<8x32xf32>
    %76 = arith.mulf %71, %75 : vector<8x32xf32>
    %c0_46 = arith.constant 0 : index
    %c0_47 = arith.constant 0 : index
    %77 = vector.load %arg15[%c0_46, %c0_47] : memref<1x32xf32, #tpu.memory_space<vmem>>, vector<1x32xf32>
    %78 = vector.broadcast %77 : vector<1x32xf32> to vector<8x32xf32>
    %79 = arith.mulf %76, %78 : vector<8x32xf32>
    %c0_48 = arith.constant 0 : index
    %c0_49 = arith.constant 0 : index
    %80 = vector.load %arg16[%c0_48, %c0_49] : memref<1x32xf32, #tpu.memory_space<vmem>>, vector<1x32xf32>
    %81 = vector.broadcast %80 : vector<1x32xf32> to vector<8x32xf32>
    %82 = arith.addf %79, %81 : vector<8x32xf32>
    %c0_50 = arith.constant 0 : index
    %c0_51 = arith.constant 0 : index
    %c0_52 = arith.constant 0 : index
    %83 = vector.load %arg17[%c0_50, %c0_51, %c0_52] : memref<1x8x32xf32, #tpu.memory_space<vmem>>, vector<1x8x32xf32>
    %84 = vector.shape_cast %83 : vector<1x8x32xf32> to vector<8x32xf32>
    %85 = vector.shape_cast %82 : vector<8x32xf32> to vector<1x8x32xf32>
    tpu.vector_store %arg17[%c0_50, %c0_51, %c0_52], %85 {strides = array<i32>} : memref<1x8x32xf32, #tpu.memory_space<vmem>>, vector<1x8x32xf32>,
    return
  }
  func.func @transform_0(%arg0: i32, %arg1: i32) -> (i32, i32, i32) {
    %c0_i32 = arith.constant 0 : i32
    %c0_i32_0 = arith.constant 0 : i32
    %c0_i32_1 = arith.constant 0 : i32
    return %arg0, %c0_i32, %c0_i32_0 : i32, i32, i32
  }
  func.func @transform_1(%arg0: i32, %arg1: i32) -> (i32, i32, i32) {
    %c0_i32 = arith.constant 0 : i32
    %c0_i32_0 = arith.constant 0 : i32
    %c0_i32_1 = arith.constant 0 : i32
    return %arg0, %c0_i32, %c0_i32_0 : i32, i32, i32
  }
  func.func @transform_2(%arg0: i32, %arg1: i32) -> (i32, i32, i32) {
    %c0_i32 = arith.constant 0 : i32
    %c0_i32_0 = arith.constant 0 : i32
    return %arg0, %arg1, %c0_i32 : i32, i32, i32
  }
  func.func @transform_3(%arg0: i32, %arg1: i32) -> (i32, i32, i32) {
    %c0_i32 = arith.constant 0 : i32
    %c0_i32_0 = arith.constant 0 : i32
    return %arg0, %arg1, %c0_i32 : i32, i32, i32
  }
  func.func @transform_4(%arg0: i32, %arg1: i32) -> (i32, i32) {
    %c0_i32 = arith.constant 0 : i32
    %c0_i32_0 = arith.constant 0 : i32
    %c0_i32_1 = arith.constant 0 : i32
    return %c0_i32, %c0_i32_0 : i32, i32
  }
  func.func @transform_5(%arg0: i32, %arg1: i32) -> (i32, i32) {
    %c0_i32 = arith.constant 0 : i32
    %c0_i32_0 = arith.constant 0 : i32
    %c0_i32_1 = arith.constant 0 : i32
    return %c0_i32, %c0_i32_0 : i32, i32
  }
  func.func @transform_6(%arg0: i32, %arg1: i32) -> (i32, i32) {
    %c0_i32 = arith.constant 0 : i32
    %c0_i32_0 = arith.constant 0 : i32
    %c0_i32_1 = arith.constant 0 : i32
    return %c0_i32, %c0_i32_0 : i32, i32
  }
  func.func @transform_7(%arg0: i32, %arg1: i32) -> (i32, i32) {
    %c0_i32 = arith.constant 0 : i32
    %c0_i32_0 = arith.constant 0 : i32
    %c0_i32_1 = arith.constant 0 : i32
    return %c0_i32, %c0_i32_0 : i32, i32
  }
  func.func @transform_8(%arg0: i32, %arg1: i32) -> (i32, i32) {
    %c0_i32 = arith.constant 0 : i32
    %c0_i32_0 = arith.constant 0 : i32
    %c0_i32_1 = arith.constant 0 : i32
    return %c0_i32, %c0_i32_0 : i32, i32
  }
  func.func @transform_9(%arg0: i32, %arg1: i32) -> (i32, i32) {
    %c0_i32 = arith.constant 0 : i32
    %c0_i32_0 = arith.constant 0 : i32
    %c0_i32_1 = arith.constant 0 : i32
    return %c0_i32, %c0_i32_0 : i32, i32
  }
  func.func @transform_10(%arg0: i32, %arg1: i32) -> (i32, i32) {
    %c0_i32 = arith.constant 0 : i32
    %c0_i32_0 = arith.constant 0 : i32
    %c0_i32_1 = arith.constant 0 : i32
    return %c0_i32, %c0_i32_0 : i32, i32
  }
  func.func @transform_11(%arg0: i32, %arg1: i32) -> (i32, i32) {
    %c0_i32 = arith.constant 0 : i32
    %c0_i32_0 = arith.constant 0 : i32
    %c0_i32_1 = arith.constant 0 : i32
    return %c0_i32, %c0_i32_0 : i32, i32
  }
  func.func @transform_12(%arg0: i32, %arg1: i32) -> (i32, i32) {
    %c0_i32 = arith.constant 0 : i32
    %c0_i32_0 = arith.constant 0 : i32
    %c0_i32_1 = arith.constant 0 : i32
    return %c0_i32, %c0_i32_0 : i32, i32
  }
  func.func @transform_13(%arg0: i32, %arg1: i32) -> (i32, i32) {
    %c0_i32 = arith.constant 0 : i32
    %c0_i32_0 = arith.constant 0 : i32
    %c0_i32_1 = arith.constant 0 : i32
    return %c0_i32, %c0_i32_0 : i32, i32
  }
  func.func @transform_14(%arg0: i32, %arg1: i32) -> (i32, i32) {
    %c0_i32 = arith.constant 0 : i32
    %c0_i32_0 = arith.constant 0 : i32
    %c0_i32_1 = arith.constant 0 : i32
    return %c0_i32, %c0_i32_0 : i32, i32
  }
  func.func @transform_15(%arg0: i32, %arg1: i32) -> (i32, i32, i32) {
    %c0_i32 = arith.constant 0 : i32
    %c0_i32_0 = arith.constant 0 : i32
    return %arg0, %arg1, %c0_i32 : i32, i32, i32
  }
}

</mosaic_0001>

<llo_original>
// kernel: tpu_custom_call.1
$region0: #{tpu_custom_call.1}
  #allocation0 [shape = 'u32[]', space=smem, size = 0x4, offset = 0x4, fixed_abs, tag = 'smem constant byte address 0x4 - core index']
  #allocation1 [shape = 'u32[72,128]{1,0:T(1,128)}', space=vmem, size = 0x9000, scoped, tag = 'internal scratch']
  %s0 = inlined_call_operand.hbm [shape: f32[2,8,32], index: 0, kind: input, shape index: {}]
  %s1 = inlined_call_operand.hbm [shape: f32[2,8,32], index: 1, kind: input, shape index: {}]
  %s2 = inlined_call_operand.hbm [shape: f32[2,8,32], index: 2, kind: input, shape index: {}]
  %s3 = inlined_call_operand.hbm [shape: f32[2,8,8], index: 3, kind: input, shape index: {}]
  %s4 = inlined_call_operand.vmem [shape: f32[32,32], index: 4, kind: input, shape index: {}]
  %s5 = inlined_call_operand.vmem [shape: f32[32,32], index: 5, kind: input, shape index: {}]
  %s6 = inlined_call_operand.vmem [shape: f32[32,32], index: 6, kind: input, shape index: {}]
  %s7 = inlined_call_operand.hbm [shape: f32[32,32], index: 7, kind: input, shape index: {}]
  %s8 = inlined_call_operand.vmem [shape: f32[1,32], index: 8, kind: input, shape index: {}]
  %s9 = inlined_call_operand.hbm [shape: f32[32,64], index: 9, kind: input, shape index: {}]
  %s10 = inlined_call_operand.vmem [shape: f32[1,64], index: 10, kind: input, shape index: {}]
  %s11 = inlined_call_operand.vmem [shape: f32[64,32], index: 11, kind: input, shape index: {}]
  %s12 = inlined_call_operand.vmem [shape: f32[1,32], index: 12, kind: input, shape index: {}]
  %s13 = inlined_call_operand.vmem [shape: f32[1,32], index: 13, kind: input, shape index: {}]
  %s14 = inlined_call_operand.vmem [shape: f32[1,32], index: 14, kind: input, shape index: {}]
  %s15 = inlined_call_operand.hbm [shape: f32[2,8,32], index: 15, kind: output, shape index: {}]
  %s16 = sld [smem:[#allocation0]]
  $region117: #{tpu_custom_call.1} parent=0
    _
  %s18 = ssub.s32 1, %s16
  %s19 = scalar_select 0, %s18, %s16
  $region1: #{tpu_custom_call.1} parent=0
    #allocation2 [shape = 'u8[8192]{0}', space=vmem, size = 0x2000, scoped, tag = 'input window, operand 0']
    #allocation3 [shape = 's32[2]{0}', space=sflag, size = 0x8, scoped, tag = 'scoped memory for tpu_custom_call.1']
    #allocation4 [shape = 's32[2]{0}', space=sflag, size = 0x8, scoped, tag = 'scoped memory for tpu_custom_call.1']
    #allocation5 [shape = 'u8[8192]{0}', space=vmem, size = 0x2000, scoped, tag = 'input window, operand 1']
    #allocation6 [shape = 's32[2]{0}', space=sflag, size = 0x8, scoped, tag = 'scoped memory for tpu_custom_call.1']
    #allocation7 [shape = 'u8[8192]{0}', space=vmem, size = 0x2000, scoped, tag = 'input window, operand 2']
    #allocation8 [shape = 'u8[8192]{0}', space=vmem, size = 0x2000, scoped, tag = 'input window, operand 3']
    #allocation9 [shape = 's32[2]{0}', space=sflag, size = 0x8, scoped, tag = 'scoped memory for tpu_custom_call.1']
    #allocation10 [shape = 'u8[16384]{0}', space=vmem, size = 0x4000, scoped, tag = 'input window, operand 7, single buffered']
    #allocation11 [shape = 'u8[16384]{0}', space=vmem, size = 0x4000, scoped, tag = 'input window, operand 9, single buffered']
    #allocation12 [shape = 's32[1]{0}', space=sflag, size = 0x4, scoped, tag = 'scoped memory for tpu_custom_call.1']
    #allocation13 [shape = 'u8[8192]{0}', space=vmem, size = 0x2000, scoped, tag = 'output window, operand 0']
    %20 = vsyncpa [#allocation3], 0
    %s21 = scalar_lea.sflag [#allocation3], 1
    %22 = vsyncpa %s21, 0
    %23 = vsyncpa [#allocation6], 0
    %s24 = scalar_lea.sflag [#allocation6], 1
    %25 = vsyncpa %s24, 0
    %26 = vsyncpa [#allocation9], 0
    %s27 = scalar_lea.sflag [#allocation9], 1
    %28 = vsyncpa %s27, 0
    %29 = vsyncpa [#allocation12], 0
    %30 = vsyncpa [#allocation4], 0
    %s31 = scalar_lea.sflag [#allocation4], 1
    %32 = vsyncpa %s31, 0
    loop: start=0, step=1, limit=4
    $region2: #{tpu_custom_call.1} parent=1 // loop_pre_header
      _
    $region3: #{tpu_custom_call.1} parent=1 // loop_header
      %s34 = sphi 0, %s38
      %p35 = scmp.ge.s32.totalorder %s34, 4
      %s41 = sphi 0, %s53
      %s42 = sphi 0, %s49
      %s43 = sphi 0, %s41
      %s44 = sphi 0, %s42
      %s45 = sphi 0, %s43
      %s46 = sphi 0, %s44
      %s56 = sphi 0, %s58
      %s59 = sphi 0, %s56
      %s60 = sphi 0, %s59
      %s76 = sphi 0, %s60
      %s82 = sphi 0, %s84
      %s85 = sphi 0, %s82
      %s86 = sphi 0, %s85
      %s102 = sphi 0, %s86
      %s110 = sphi 0, %s112
      %s113 = sphi 0, %s110
      %s114 = sphi 0, %s113
      %s130 = sphi 0, %s114
      %s138 = sphi 0, %s140
      %s141 = sphi 0, %s138
      %s142 = sphi 0, %s141
      %s158 = sphi 0, %s142
      %s162 = sphi 0, %s162
      %s164 = sphi 0, %s162
      %s165 = sphi 0, %s164
      %s179 = sphi 0, %s165
      %s183 = sphi 0, %s183
      %s185 = sphi 0, %s183
      %s186 = sphi 0, %s185
      %s200 = sphi 0, %s186
      %s204 = sphi 0, %s204
      %s206 = sphi 0, %s204
      %s207 = sphi 0, %s206
      %s221 = sphi 0, %s207
      %s225 = sphi 0, %s225
      %s227 = sphi 0, %s225
      %s228 = sphi 0, %s227
      %s242 = sphi 0, %s228
      %s246 = sphi 0, %s246
      %s248 = sphi 0, %s246
      %s249 = sphi 0, %s248
      %s263 = sphi 0, %s249
      %s267 = sphi 0, %s267
      %s269 = sphi 0, %s267
      %s270 = sphi 0, %s269
      %s284 = sphi 0, %s270
      %s288 = sphi 0, %s288
      %s290 = sphi 0, %s288
      %s291 = sphi 0, %s290
      %s305 = sphi 0, %s291
      %s309 = sphi 0, %s309
      %s311 = sphi 0, %s309
      %s312 = sphi 0, %s311
      %s326 = sphi 0, %s312
      %s330 = sphi 0, %s330
      %s332 = sphi 0, %s330
      %s333 = sphi 0, %s332
      %s347 = sphi 0, %s333
      %s351 = sphi 0, %s351
      %s353 = sphi 0, %s351
      %s354 = sphi 0, %s353
      %s368 = sphi 0, %s354
      %s372 = sphi 0, %s372
      %s374 = sphi 0, %s372
      %s375 = sphi 0, %s374
      %s389 = sphi 0, %s375
      %s397 = sphi 0, %s399
      %s400 = sphi 0, %s397
      %s401 = sphi 0, %s400
      %s417 = sphi 0, %s401
    $region4: #{tpu_custom_call.1} parent=1 // loop_header_branch
      %37 = sbr.rel (%p35) target = $region8
    $region5: #{tpu_custom_call.1} parent=1 // loop_body
      %s39 = ssub.s32 %s34, 1
      %s40 = ssub.s32 %s34, 2
      %s47 = sadd.s32 1, %s42
      %p48 = scmp.ge.s32.totalorder %s47, 1
      %s49 = scalar_select %p48, 0, %s47
      %s50 = sadd.s32 1, %s41
      %s51 = scalar_select %p48, %s50, %s41
      %p52 = scmp.ge.s32.totalorder %s51, 2
      %s53 = scalar_select %p52, 0, %s51
      %s54 = ssub.s32 %s41, %s53
      %p55 = scmp.eq.s32.totalorder %s54, 0
      %s57 = sadd.s32 %s56, 1
      %s58 = scalar_select %p55, %s56, %s57
      %p61 = pneg %p55
      %p62 = scmp.eq.s32.totalorder %s34, 1
      %p63 = por %p61, %p62
      %p64 = scmp.ne.s32.totalorder %s56, %s59
      %p65 = scmp.eq.s32.totalorder %s34, 0
      %p66 = por %p64, %p65
      %p67 = scmp.ne.s32.totalorder %s56, %s59
      %p68 = scmp.eq.s32.totalorder %s39, 1
      %p69 = por %p67, %p68
      %p70 = scmp.ne.s32.totalorder %s59, %s60
      %p71 = scmp.eq.s32.totalorder %s39, 0
      %p72 = por %p70, %p71
      %p73 = scmp.ne.s32.totalorder %s59, %s60
      %p74 = scmp.eq.s32.totalorder %s40, 1
      %p75 = por %p73, %p74
      %p77 = scmp.ne.s32.totalorder %s60, %s76
      %p78 = scmp.eq.s32.totalorder %s40, 0
      %p79 = por %p77, %p78
      %s80 = ssub.s32 %s41, %s53
      %p81 = scmp.eq.s32.totalorder %s80, 0
      %s83 = sadd.s32 %s82, 1
      %s84 = scalar_select %p81, %s82, %s83
      %p87 = pneg %p81
      %p88 = scmp.eq.s32.totalorder %s34, 1
      %p89 = por %p87, %p88
      %p90 = scmp.ne.s32.totalorder %s82, %s85
      %p91 = scmp.eq.s32.totalorder %s34, 0
      %p92 = por %p90, %p91
      %p93 = scmp.ne.s32.totalorder %s82, %s85
      %p94 = scmp.eq.s32.totalorder %s39, 1
      %p95 = por %p93, %p94
      %p96 = scmp.ne.s32.totalorder %s85, %s86
      %p97 = scmp.eq.s32.totalorder %s39, 0
      %p98 = por %p96, %p97
      %p99 = scmp.ne.s32.totalorder %s85, %s86
      %p100 = scmp.eq.s32.totalorder %s40, 1
      %p101 = por %p99, %p100
      %p103 = scmp.ne.s32.totalorder %s86, %s102
      %p104 = scmp.eq.s32.totalorder %s40, 0
      %p105 = por %p103, %p104
      %s106 = ssub.s32 %s41, %s53
      %s107 = ssub.s32 %s42, %s49
      %s108 = sor.u32 %s106, %s107
      %p109 = scmp.eq.s32.totalorder %s108, 0
      %s111 = sadd.s32 %s110, 1
      %s112 = scalar_select %p109, %s110, %s111
      %p115 = pneg %p109
      %p116 = scmp.eq.s32.totalorder %s34, 1
      %p117 = por %p115, %p116
      %p118 = scmp.ne.s32.totalorder %s110, %s113
      %p119 = scmp.eq.s32.totalorder %s34, 0
      %p120 = por %p118, %p119
      %p121 = scmp.ne.s32.totalorder %s110, %s113
      %p122 = scmp.eq.s32.totalorder %s39, 1
      %p123 = por %p121, %p122
      %p124 = scmp.ne.s32.totalorder %s113, %s114
      %p125 = scmp.eq.s32.totalorder %s39, 0
      %p126 = por %p124, %p125
      %p127 = scmp.ne.s32.totalorder %s113, %s114
      %p128 = scmp.eq.s32.totalorder %s40, 1
      %p129 = por %p127, %p128
      %p131 = scmp.ne.s32.totalorder %s114, %s130
      %p132 = scmp.eq.s32.totalorder %s40, 0
      %p133 = por %p131, %p132
      %s134 = ssub.s32 %s41, %s53
      %s135 = ssub.s32 %s42, %s49
      %s136 = sor.u32 %s134, %s135
      %p137 = scmp.eq.s32.totalorder %s136, 0
      %s139 = sadd.s32 %s138, 1
      %s140 = scalar_select %p137, %s138, %s139
      %p143 = pneg %p137
      %p144 = scmp.eq.s32.totalorder %s34, 1
      %p145 = por %p143, %p144
      %p146 = scmp.ne.s32.totalorder %s138, %s141
      %p147 = scmp.eq.s32.totalorder %s34, 0
      %p148 = por %p146, %p147
      %p149 = scmp.ne.s32.totalorder %s138, %s141
      %p150 = scmp.eq.s32.totalorder %s39, 1
      %p151 = por %p149, %p150
      %p152 = scmp.ne.s32.totalorder %s141, %s142
      %p153 = scmp.eq.s32.totalorder %s39, 0
      %p154 = por %p152, %p153
      %p155 = scmp.ne.s32.totalorder %s141, %s142
      %p156 = scmp.eq.s32.totalorder %s40, 1
      %p157 = por %p155, %p156
      %p159 = scmp.ne.s32.totalorder %s142, %s158
      %p160 = scmp.eq.s32.totalorder %s40, 0
      %p161 = por %p159, %p160
      %s163 = sadd.s32 %s162, 1
      %p166 = scmp.eq.s32.totalorder %s34, 1
      %p167 = scmp.ne.s32.totalorder %s162, %s164
      %p168 = scmp.eq.s32.totalorder %s34, 0
      %p169 = por %p167, %p168
      %p170 = scmp.ne.s32.totalorder %s162, %s164
      %p171 = scmp.eq.s32.totalorder %s39, 1
      %p172 = por %p170, %p171
      %p173 = scmp.ne.s32.totalorder %s164, %s165
      %p174 = scmp.eq.s32.totalorder %s39, 0
      %p175 = por %p173, %p174
      %p176 = scmp.ne.s32.totalorder %s164, %s165
      %p177 = scmp.eq.s32.totalorder %s40, 1
      %p178 = por %p176, %p177
      %p180 = scmp.ne.s32.totalorder %s165, %s179
      %p181 = scmp.eq.s32.totalorder %s40, 0
      %p182 = por %p180, %p181
      %s184 = sadd.s32 %s183, 1
      %p187 = scmp.eq.s32.totalorder %s34, 1
      %p188 = scmp.ne.s32.totalorder %s183, %s185
      %p189 = scmp.eq.s32.totalorder %s34, 0
      %p190 = por %p188, %p189
      %p191 = scmp.ne.s32.totalorder %s183, %s185
      %p192 = scmp.eq.s32.totalorder %s39, 1
      %p193 = por %p191, %p192
      %p194 = scmp.ne.s32.totalorder %s185, %s186
      %p195 = scmp.eq.s32.totalorder %s39, 0
      %p196 = por %p194, %p195
      %p197 = scmp.ne.s32.totalorder %s185, %s186
      %p198 = scmp.eq.s32.totalorder %s40, 1
      %p199 = por %p197, %p198
      %p201 = scmp.ne.s32.totalorder %s186, %s200
      %p202 = scmp.eq.s32.totalorder %s40, 0
      %p203 = por %p201, %p202
      %s205 = sadd.s32 %s204, 1
      %p208 = scmp.eq.s32.totalorder %s34, 1
      %p209 = scmp.ne.s32.totalorder %s204, %s206
      %p210 = scmp.eq.s32.totalorder %s34, 0
      %p211 = por %p209, %p210
      %p212 = scmp.ne.s32.totalorder %s204, %s206
      %p213 = scmp.eq.s32.totalorder %s39, 1
      %p214 = por %p212, %p213
      %p215 = scmp.ne.s32.totalorder %s206, %s207
      %p216 = scmp.eq.s32.totalorder %s39, 0
      %p217 = por %p215, %p216
      %p218 = scmp.ne.s32.totalorder %s206, %s207
      %p219 = scmp.eq.s32.totalorder %s40, 1
      %p220 = por %p218, %p219
      %p222 = scmp.ne.s32.totalorder %s207, %s221
      %p223 = scmp.eq.s32.totalorder %s40, 0
      %p224 = por %p222, %p223
      %s226 = sadd.s32 %s225, 1
      %p229 = scmp.eq.s32.totalorder %s34, 1
      %p230 = scmp.ne.s32.totalorder %s225, %s227
      %p231 = scmp.eq.s32.totalorder %s34, 0
      %p232 = por %p230, %p231
      %p233 = scmp.ne.s32.totalorder %s225, %s227
      %p234 = scmp.eq.s32.totalorder %s39, 1
      %p235 = por %p233, %p234
      %p236 = scmp.ne.s32.totalorder %s227, %s228
      %p237 = scmp.eq.s32.totalorder %s39, 0
      %p238 = por %p236, %p237
      %p239 = scmp.ne.s32.totalorder %s227, %s228
      %p240 = scmp.eq.s32.totalorder %s40, 1
      %p241 = por %p239, %p240
      %p243 = scmp.ne.s32.totalorder %s228, %s242
      %p244 = scmp.eq.s32.totalorder %s40, 0
      %p245 = por %p243, %p244
      %s247 = sadd.s32 %s246, 1
      %p250 = scmp.eq.s32.totalorder %s34, 1
      %p251 = scmp.ne.s32.totalorder %s246, %s248
      %p252 = scmp.eq.s32.totalorder %s34, 0
      %p253 = por %p251, %p252
      %p254 = scmp.ne.s32.totalorder %s246, %s248
      %p255 = scmp.eq.s32.totalorder %s39, 1
      %p256 = por %p254, %p255
      %p257 = scmp.ne.s32.totalorder %s248, %s249
      %p258 = scmp.eq.s32.totalorder %s39, 0
      %p259 = por %p257, %p258
      %p260 = scmp.ne.s32.totalorder %s248, %s249
      %p261 = scmp.eq.s32.totalorder %s40, 1
      %p262 = por %p260, %p261
      %p264 = scmp.ne.s32.totalorder %s249, %s263
      %p265 = scmp.eq.s32.totalorder %s40, 0
      %p266 = por %p264, %p265
      %s268 = sadd.s32 %s267, 1
      %p271 = scmp.eq.s32.totalorder %s34, 1
      %p272 = scmp.ne.s32.totalorder %s267, %s269
      %p273 = scmp.eq.s32.totalorder %s34, 0
      %p274 = por %p272, %p273
      %p275 = scmp.ne.s32.totalorder %s267, %s269
      %p276 = scmp.eq.s32.totalorder %s39, 1
      %p277 = por %p275, %p276
      %p278 = scmp.ne.s32.totalorder %s269, %s270
      %p279 = scmp.eq.s32.totalorder %s39, 0
      %p280 = por %p278, %p279
      %p281 = scmp.ne.s32.totalorder %s269, %s270
      %p282 = scmp.eq.s32.totalorder %s40, 1
      %p283 = por %p281, %p282
      %p285 = scmp.ne.s32.totalorder %s270, %s284
      %p286 = scmp.eq.s32.totalorder %s40, 0
      %p287 = por %p285, %p286
      %s289 = sadd.s32 %s288, 1
      %p292 = scmp.eq.s32.totalorder %s34, 1
      %p293 = scmp.ne.s32.totalorder %s288, %s290
      %p294 = scmp.eq.s32.totalorder %s34, 0
      %p295 = por %p293, %p294
      %p296 = scmp.ne.s32.totalorder %s288, %s290
      %p297 = scmp.eq.s32.totalorder %s39, 1
      %p298 = por %p296, %p297
      %p299 = scmp.ne.s32.totalorder %s290, %s291
      %p300 = scmp.eq.s32.totalorder %s39, 0
      %p301 = por %p299, %p300
      %p302 = scmp.ne.s32.totalorder %s290, %s291
      %p303 = scmp.eq.s32.totalorder %s40, 1
      %p304 = por %p302, %p303
      %p306 = scmp.ne.s32.totalorder %s291, %s305
      %p307 = scmp.eq.s32.totalorder %s40, 0
      %p308 = por %p306, %p307
      %s310 = sadd.s32 %s309, 1
      %p313 = scmp.eq.s32.totalorder %s34, 1
      %p314 = scmp.ne.s32.totalorder %s309, %s311
      %p315 = scmp.eq.s32.totalorder %s34, 0
      %p316 = por %p314, %p315
      %p317 = scmp.ne.s32.totalorder %s309, %s311
      %p318 = scmp.eq.s32.totalorder %s39, 1
      %p319 = por %p317, %p318
      %p320 = scmp.ne.s32.totalorder %s311, %s312
      %p321 = scmp.eq.s32.totalorder %s39, 0
      %p322 = por %p320, %p321
      %p323 = scmp.ne.s32.totalorder %s311, %s312
      %p324 = scmp.eq.s32.totalorder %s40, 1
      %p325 = por %p323, %p324
      %p327 = scmp.ne.s32.totalorder %s312, %s326
      %p328 = scmp.eq.s32.totalorder %s40, 0
      %p329 = por %p327, %p328
      %s331 = sadd.s32 %s330, 1
      %p334 = scmp.eq.s32.totalorder %s34, 1
      %p335 = scmp.ne.s32.totalorder %s330, %s332
      %p336 = scmp.eq.s32.totalorder %s34, 0
      %p337 = por %p335, %p336
      %p338 = scmp.ne.s32.totalorder %s330, %s332
      %p339 = scmp.eq.s32.totalorder %s39, 1
      %p340 = por %p338, %p339
      %p341 = scmp.ne.s32.totalorder %s332, %s333
      %p342 = scmp.eq.s32.totalorder %s39, 0
      %p343 = por %p341, %p342
      %p344 = scmp.ne.s32.totalorder %s332, %s333
      %p345 = scmp.eq.s32.totalorder %s40, 1
      %p346 = por %p344, %p345
      %p348 = scmp.ne.s32.totalorder %s333, %s347
      %p349 = scmp.eq.s32.totalorder %s40, 0
      %p350 = por %p348, %p349
      %s352 = sadd.s32 %s351, 1
      %p355 = scmp.eq.s32.totalorder %s34, 1
      %p356 = scmp.ne.s32.totalorder %s351, %s353
      %p357 = scmp.eq.s32.totalorder %s34, 0
      %p358 = por %p356, %p357
      %p359 = scmp.ne.s32.totalorder %s351, %s353
      %p360 = scmp.eq.s32.totalorder %s39, 1
      %p361 = por %p359, %p360
      %p362 = scmp.ne.s32.totalorder %s353, %s354
      %p363 = scmp.eq.s32.totalorder %s39, 0
      %p364 = por %p362, %p363
      %p365 = scmp.ne.s32.totalorder %s353, %s354
      %p366 = scmp.eq.s32.totalorder %s40, 1
      %p367 = por %p365, %p366
      %p369 = scmp.ne.s32.totalorder %s354, %s368
      %p370 = scmp.eq.s32.totalorder %s40, 0
      %p371 = por %p369, %p370
      %s373 = sadd.s32 %s372, 1
      %p376 = scmp.eq.s32.totalorder %s34, 1
      %p377 = scmp.ne.s32.totalorder %s372, %s374
      %p378 = scmp.eq.s32.totalorder %s34, 0
      %p379 = por %p377, %p378
      %p380 = scmp.ne.s32.totalorder %s372, %s374
      %p381 = scmp.eq.s32.totalorder %s39, 1
      %p382 = por %p380, %p381
      %p383 = scmp.ne.s32.totalorder %s374, %s375
      %p384 = scmp.eq.s32.totalorder %s39, 0
      %p385 = por %p383, %p384
      %p386 = scmp.ne.s32.totalorder %s374, %s375
      %p387 = scmp.eq.s32.totalorder %s40, 1
      %p388 = por %p386, %p387
      %p390 = scmp.ne.s32.totalorder %s375, %s389
      %p391 = scmp.eq.s32.totalorder %s40, 0
      %p392 = por %p390, %p391
      %s393 = ssub.s32 %s41, %s53
      %s394 = ssub.s32 %s42, %s49
      %s395 = sor.u32 %s393, %s394
      %p396 = scmp.eq.s32.totalorder %s395, 0
      %s398 = sadd.s32 %s397, 1
      %s399 = scalar_select %p396, %s397, %s398
      %p402 = pneg %p396
      %p403 = scmp.eq.s32.totalorder %s34, 1
      %p404 = por %p402, %p403
      %p405 = scmp.ne.s32.totalorder %s397, %s400
      %p406 = scmp.eq.s32.totalorder %s34, 0
      %p407 = por %p405, %p406
      %p408 = scmp.ne.s32.totalorder %s397, %s400
      %p409 = scmp.eq.s32.totalorder %s39, 1
      %p410 = por %p408, %p409
      %p411 = scmp.ne.s32.totalorder %s400, %s401
      %p412 = scmp.eq.s32.totalorder %s39, 0
      %p413 = por %p411, %p412
      %p414 = scmp.ne.s32.totalorder %s400, %s401
      %p415 = scmp.eq.s32.totalorder %s40, 1
      %p416 = por %p414, %p415
      %p418 = scmp.ne.s32.totalorder %s401, %s417
      %p419 = scmp.eq.s32.totalorder %s40, 0
      %p420 = por %p418, %p419
      %p421 = scmp.le.s32.totalorder 1, %s34
      %p422 = scmp.lt.s32.totalorder %s34, 3
      %p423 = pnand %p421, %p422
      %p424 = pneg %p423
      // Predicated region
      $region9: #{tpu_custom_call.1} parent=5 // pred_check
        _
      $region10: #{tpu_custom_call.1} parent=5 // pred_check_branch
        %426 = sbr.rel (%p423) target = $region12
      $region11: #{tpu_custom_call.1} parent=5 // pred_region
        %s427 = ssub.s32 %s34, 1
        // Predicated region
        $region13: #{tpu_custom_call.1} parent=11 // pred_check
          %p428 = pneg %p175
        $region14: #{tpu_custom_call.1} parent=11 // pred_check_branch
          %430 = sbr.rel (%p428) target = $region16
        $region15: #{tpu_custom_call.1} parent=11 // pred_region
          _
        $region16: #{tpu_custom_call.1} parent=11 // pred_fallthru
          _
        // Predicated region
        $region17: #{tpu_custom_call.1} parent=11 // pred_check
          %p431 = pneg %p196
        $region18: #{tpu_custom_call.1} parent=11 // pred_check_branch
          %433 = sbr.rel (%p431) target = $region20
        $region19: #{tpu_custom_call.1} parent=11 // pred_region
          _
        $region20: #{tpu_custom_call.1} parent=11 // pred_fallthru
          _
        // Predicated region
        $region21: #{tpu_custom_call.1} parent=11 // pred_check
          %p434 = pneg %p217
        $region22: #{tpu_custom_call.1} parent=11 // pred_check_branch
          %436 = sbr.rel (%p434) target = $region24
        $region23: #{tpu_custom_call.1} parent=11 // pred_region
          _
        $region24: #{tpu_custom_call.1} parent=11 // pred_fallthru
          _
        // Predicated region
        $region25: #{tpu_custom_call.1} parent=11 // pred_check
          %p437 = pneg %p238
        $region26: #{tpu_custom_call.1} parent=11 // pred_check_branch
          %439 = sbr.rel (%p437) target = $region28
        $region27: #{tpu_custom_call.1} parent=11 // pred_region
          %441 = vsyncadd [#allocation9], 0
          %s442 = sshll.u32 %s7, 4
          %s443 = int_to_ptr.hbm [resolvable:$true] %s442
          %s444 = sshll.u32 [#allocation10], 4
          %s445 = int_to_ptr.vmem [resolvable:$true] %s444
          %450 = dma.hbm_to_vmem [thread:$0]  %s443, 512, %s445, [#allocation9], 128, 128, 8
        $region28: #{tpu_custom_call.1} parent=11 // pred_fallthru
          _
        // Predicated region
        $region29: #{tpu_custom_call.1} parent=11 // pred_check
          %p451 = pneg %p259
        $region30: #{tpu_custom_call.1} parent=11 // pred_check_branch
          %453 = sbr.rel (%p451) target = $region32
        $region31: #{tpu_custom_call.1} parent=11 // pred_region
          _
        $region32: #{tpu_custom_call.1} parent=11 // pred_fallthru
          _
        // Predicated region
        $region33: #{tpu_custom_call.1} parent=11 // pred_check
          %p454 = pneg %p280
        $region34: #{tpu_custom_call.1} parent=11 // pred_check_branch
          %456 = sbr.rel (%p454) target = $region36
        $region35: #{tpu_custom_call.1} parent=11 // pred_region
          %458 = vsyncadd [#allocation12], 0
          %s459 = sshll.u32 %s9, 4
          %s460 = int_to_ptr.hbm [resolvable:$true] %s459
          %s461 = sshll.u32 [#allocation11], 4
          %s462 = int_to_ptr.vmem [resolvable:$true] %s461
          %467 = dma.hbm_to_vmem [thread:$0]  %s460, 512, %s462, [#allocation12], 128, 128, 8
        $region36: #{tpu_custom_call.1} parent=11 // pred_fallthru
          _
        // Predicated region
        $region37: #{tpu_custom_call.1} parent=11 // pred_check
          %p468 = pneg %p301
        $region38: #{tpu_custom_call.1} parent=11 // pred_check_branch
          %470 = sbr.rel (%p468) target = $region40
        $region39: #{tpu_custom_call.1} parent=11 // pred_region
          _
        $region40: #{tpu_custom_call.1} parent=11 // pred_fallthru
          _
        // Predicated region
        $region41: #{tpu_custom_call.1} parent=11 // pred_check
          %p471 = pneg %p322
        $region42: #{tpu_custom_call.1} parent=11 // pred_check_branch
          %473 = sbr.rel (%p471) target = $region44
        $region43: #{tpu_custom_call.1} parent=11 // pred_region
          _
        $region44: #{tpu_custom_call.1} parent=11 // pred_fallthru
          _
        // Predicated region
        $region45: #{tpu_custom_call.1} parent=11 // pred_check
          %p474 = pneg %p343
        $region46: #{tpu_custom_call.1} parent=11 // pred_check_branch
          %476 = sbr.rel (%p474) target = $region48
        $region47: #{tpu_custom_call.1} parent=11 // pred_region
          _
        $region48: #{tpu_custom_call.1} parent=11 // pred_fallthru
          _
        // Predicated region
        $region49: #{tpu_custom_call.1} parent=11 // pred_check
          %p477 = pneg %p364
        $region50: #{tpu_custom_call.1} parent=11 // pred_check_branch
          %479 = sbr.rel (%p477) target = $region52
        $region51: #{tpu_custom_call.1} parent=11 // pred_region
          _
        $region52: #{tpu_custom_call.1} parent=11 // pred_fallthru
          _
        // Predicated region
        $region53: #{tpu_custom_call.1} parent=11 // pred_check
          %p480 = pneg %p385
        $region54: #{tpu_custom_call.1} parent=11 // pred_check_branch
          %482 = sbr.rel (%p480) target = $region56
        $region55: #{tpu_custom_call.1} parent=11 // pred_region
          _
        $region56: #{tpu_custom_call.1} parent=11 // pred_fallthru
          _
      $region12: #{tpu_custom_call.1} parent=5 // pred_fallthru
        _
      %p483 = scmp.lt.s32.totalorder %s34, 2
      // Predicated region
      $region57: #{tpu_custom_call.1} parent=5 // pred_check
        %p484 = pneg %p483
      $region58: #{tpu_custom_call.1} parent=5 // pred_check_branch
        %486 = sbr.rel (%p484) target = $region60
      $region59: #{tpu_custom_call.1} parent=5 // pred_region
        // Predicated region
        $region61: #{tpu_custom_call.1} parent=59 // pred_check
          %p487 = pneg %p66
        $region62: #{tpu_custom_call.1} parent=59 // pred_check_branch
          %489 = sbr.rel (%p487) target = $region64
        $region63: #{tpu_custom_call.1} parent=59 // pred_region
          %s490 = sand.u32 %s56, 1
          %s491 = scalar_lea.sflag [#allocation3], %s490
          %s492 = sand.u32 %s56, 1
          %s493 = smul.addr %s492, 8
          %s494 = scalar_lea.vmem [#allocation2], %s493
          %496 = vsyncadd %s491, 0
          %s497 = smul.addr %s41, 8
          %s498 = scalar_lea.hbm %s0, %s497
          %s500 = sshll.u32 %s498, 4
          %s501 = int_to_ptr.hbm [resolvable:$true] %s500
          %s502 = sshll.u32 %s494, 4
          %s503 = int_to_ptr.vmem [resolvable:$true] %s502
          %505 = dma.hbm_to_vmem [thread:$0]  %s501, 128, %s503, %s491
        $region64: #{tpu_custom_call.1} parent=59 // pred_fallthru
          _
        // Predicated region
        $region65: #{tpu_custom_call.1} parent=59 // pred_check
          %p506 = pneg %p92
        $region66: #{tpu_custom_call.1} parent=59 // pred_check_branch
          %508 = sbr.rel (%p506) target = $region68
        $region67: #{tpu_custom_call.1} parent=59 // pred_region
          %s509 = sand.u32 %s34, 1
          %s510 = scalar_lea.sflag [#allocation6], %s509
          %s511 = sand.u32 %s82, 1
          %s512 = smul.addr %s511, 8
          %s513 = scalar_lea.vmem [#allocation5], %s512
          %515 = vsyncadd %s510, 0
          %s516 = smul.addr %s41, 8
          %s517 = scalar_lea.hbm %s1, %s516
          %s519 = sshll.u32 %s517, 4
          %s520 = int_to_ptr.hbm [resolvable:$true] %s519
          %s521 = sshll.u32 %s513, 4
          %s522 = int_to_ptr.vmem [resolvable:$true] %s521
          %524 = dma.hbm_to_vmem [thread:$0]  %s520, 128, %s522, %s510
        $region68: #{tpu_custom_call.1} parent=59 // pred_fallthru
          _
        // Predicated region
        $region69: #{tpu_custom_call.1} parent=59 // pred_check
          %p525 = pneg %p120
        $region70: #{tpu_custom_call.1} parent=59 // pred_check_branch
          %527 = sbr.rel (%p525) target = $region72
        $region71: #{tpu_custom_call.1} parent=59 // pred_region
          %s528 = sand.u32 %s34, 1
          %s529 = scalar_lea.sflag [#allocation6], %s528
          %s530 = sand.u32 %s110, 1
          %s531 = smul.addr %s530, 8
          %s532 = scalar_lea.vmem [#allocation7], %s531
          %534 = vsyncadd %s529, 0
          %s535 = sadd.s32 %s42, %s41
          %s536 = smul.addr %s535, 8
          %s537 = scalar_lea.hbm %s2, %s536
          %s539 = sshll.u32 %s537, 4
          %s540 = int_to_ptr.hbm [resolvable:$true] %s539
          %s541 = sshll.u32 %s532, 4
          %s542 = int_to_ptr.vmem [resolvable:$true] %s541
          %544 = dma.hbm_to_vmem [thread:$0]  %s540, 128, %s542, %s529
        $region72: #{tpu_custom_call.1} parent=59 // pred_fallthru
          _
        // Predicated region
        $region73: #{tpu_custom_call.1} parent=59 // pred_check
          %p545 = pneg %p148
        $region74: #{tpu_custom_call.1} parent=59 // pred_check_branch
          %547 = sbr.rel (%p545) target = $region76
        $region75: #{tpu_custom_call.1} parent=59 // pred_region
          %s548 = sand.u32 %s34, 1
          %s549 = scalar_lea.sflag [#allocation9], %s548
          %s550 = sand.u32 %s138, 1
          %s551 = smul.addr %s550, 8
          %s552 = scalar_lea.vmem [#allocation8], %s551
          %554 = vsyncadd %s549, 0
          %s555 = sadd.s32 %s42, %s41
          %s556 = smul.addr %s555, 8
          %s557 = scalar_lea.hbm %s3, %s556
          %s559 = sshll.u32 %s557, 4
          %s560 = int_to_ptr.hbm [resolvable:$true] %s559
          %s561 = sshll.u32 %s552, 4
          %s562 = int_to_ptr.vmem [resolvable:$true] %s561
          %564 = dma.hbm_to_vmem [thread:$0]  %s560, 128, %s562, %s549
        $region76: #{tpu_custom_call.1} parent=59 // pred_fallthru
          _
      $region60: #{tpu_custom_call.1} parent=5 // pred_fallthru
        _
      %p565 = scmp.le.s32.totalorder 1, %s34
      %p566 = scmp.lt.s32.totalorder %s34, 3
      %p567 = pnand %p565, %p566
      %p568 = pneg %p567
      // Predicated region
      $region77: #{tpu_custom_call.1} parent=5 // pred_check
        _
      $region78: #{tpu_custom_call.1} parent=5 // pred_check_branch
        %570 = sbr.rel (%p567) target = $region80
      $region79: #{tpu_custom_call.1} parent=5 // pred_region
        %s571 = ssub.s32 %s34, 1
        %s572 = sand.u32 %s59, 1
        %s573 = scalar_lea.sflag [#allocation3], %s572
        %s574 = sand.u32 %s59, 1
        %s575 = smul.addr %s574, 8
        %s576 = scalar_lea.vmem [#allocation2], %s575
        // Predicated region
        $region81: #{tpu_custom_call.1} parent=79 // pred_check
          %p577 = pneg %p72
        $region82: #{tpu_custom_call.1} parent=79 // pred_check_branch
          %579 = sbr.rel (%p577) target = $region84
        $region83: #{tpu_custom_call.1} parent=79 // pred_region
          %581 = dma.done %s573, 128
        $region84: #{tpu_custom_call.1} parent=79 // pred_fallthru
          _
        %s582 = sand.u32 %s39, 1
        %s583 = scalar_lea.sflag [#allocation6], %s582
        %s584 = sand.u32 %s85, 1
        %s585 = smul.addr %s584, 8
        %s586 = scalar_lea.vmem [#allocation5], %s585
        // Predicated region
        $region85: #{tpu_custom_call.1} parent=79 // pred_check
          %p587 = pneg %p98
        $region86: #{tpu_custom_call.1} parent=79 // pred_check_branch
          %589 = sbr.rel (%p587) target = $region88
        $region87: #{tpu_custom_call.1} parent=79 // pred_region
          %591 = dma.done %s583, 128
        $region88: #{tpu_custom_call.1} parent=79 // pred_fallthru
          _
        %s592 = sand.u32 %s39, 1
        %s593 = scalar_lea.sflag [#allocation6], %s592
        %s594 = sand.u32 %s113, 1
        %s595 = smul.addr %s594, 8
        %s596 = scalar_lea.vmem [#allocation7], %s595
        // Predicated region
        $region89: #{tpu_custom_call.1} parent=79 // pred_check
          %p597 = pneg %p126
        $region90: #{tpu_custom_call.1} parent=79 // pred_check_branch
          %599 = sbr.rel (%p597) target = $region92
        $region91: #{tpu_custom_call.1} parent=79 // pred_region
          %601 = dma.done %s593, 128
        $region92: #{tpu_custom_call.1} parent=79 // pred_fallthru
          _
        %s602 = sand.u32 %s39, 1
        %s603 = scalar_lea.sflag [#allocation9], %s602
        %s604 = sand.u32 %s141, 1
        %s605 = smul.addr %s604, 8
        %s606 = scalar_lea.vmem [#allocation8], %s605
        // Predicated region
        $region93: #{tpu_custom_call.1} parent=79 // pred_check
          %p607 = pneg %p154
        $region94: #{tpu_custom_call.1} parent=79 // pred_check_branch
          %609 = sbr.rel (%p607) target = $region96
        $region95: #{tpu_custom_call.1} parent=79 // pred_region
          %611 = dma.done %s603, 128
        $region96: #{tpu_custom_call.1} parent=79 // pred_fallthru
          _
        // Predicated region
        $region97: #{tpu_custom_call.1} parent=79 // pred_check
          %p612 = pneg %p238
        $region98: #{tpu_custom_call.1} parent=79 // pred_check_branch
          %614 = sbr.rel (%p612) target = $region100
        $region99: #{tpu_custom_call.1} parent=79 // pred_region
          %616 = dma.done [#allocation9], 512
        $region100: #{tpu_custom_call.1} parent=79 // pred_fallthru
          _
        // Predicated region
        $region101: #{tpu_custom_call.1} parent=79 // pred_check
          %p617 = pneg %p280
        $region102: #{tpu_custom_call.1} parent=79 // pred_check_branch
          %619 = sbr.rel (%p617) target = $region104
        $region103: #{tpu_custom_call.1} parent=79 // pred_region
          %621 = dma.done [#allocation12], 512
        $region104: #{tpu_custom_call.1} parent=79 // pred_fallthru
          _
        %s622 = sand.u32 %s59, 1
        %s623 = scalar_lea.sflag [#allocation3], %s622
        %s624 = sand.u32 %s59, 1
        %s625 = smul.addr %s624, 8
        %s626 = scalar_lea.vmem [#allocation2], %s625
        %p627 = pneg %p72
        %p628 = pneg %p69
        %s629 = sand.u32 %s39, 1
        %s630 = scalar_lea.sflag [#allocation6], %s629
        %s631 = sand.u32 %s85, 1
        %s632 = smul.addr %s631, 8
        %s633 = scalar_lea.vmem [#allocation5], %s632
        %p634 = pneg %p98
        %p635 = pneg %p95
        %s636 = sand.u32 %s39, 1
        %s637 = scalar_lea.sflag [#allocation6], %s636
        %s638 = sand.u32 %s113, 1
        %s639 = smul.addr %s638, 8
        %s640 = scalar_lea.vmem [#allocation7], %s639
        %p641 = pneg %p126
        %p642 = pneg %p123
        %s643 = sand.u32 %s39, 1
        %s644 = scalar_lea.sflag [#allocation9], %s643
        %s645 = sand.u32 %s141, 1
        %s646 = smul.addr %s645, 8
        %s647 = scalar_lea.vmem [#allocation8], %s646
        %p648 = pneg %p154
        %p649 = pneg %p151
        %p650 = pneg %p175
        %p651 = pneg %p172
        %p652 = pneg %p196
        %p653 = pneg %p193
        %p654 = pneg %p217
        %p655 = pneg %p214
        %p656 = pneg %p238
        %p657 = pneg %p235
        %p658 = pneg %p259
        %p659 = pneg %p256
        %p660 = pneg %p280
        %p661 = pneg %p277
        %p662 = pneg %p301
        %p663 = pneg %p298
        %p664 = pneg %p322
        %p665 = pneg %p319
        %p666 = pneg %p343
        %p667 = pneg %p340
        %p668 = pneg %p364
        %p669 = pneg %p361
        %p670 = pneg %p385
        %p671 = pneg %p382
        %p672 = pneg %p413
        %p673 = pneg %p410
        %s674 = sand.u32 %s400, 1
        %s675 = scalar_lea.sflag [#allocation4], %s674
        %s676 = sand.u32 %s400, 1
        %s677 = smul.addr %s676, 8
        %s678 = scalar_lea.vmem [#allocation13], %s677
        %v679 = vld [vmem:[%s576] sm:$0xff]
        %v680 = vld [vmem:[%s586] sm:$0xff]
        %v681 = vld [vmem:[%s596] sm:$0xff]
        %v682 = vld [vmem:[%s606] sm:$0xff]
        %v683 = vld [vmem:[%s4] sm:$0xff]
        %v684 = vld [vmem:[%s4 + $0x8] sm:$0xff]
        %v685 = vld [vmem:[%s4 + $0x10] sm:$0xff]
        %v686 = vld [vmem:[%s4 + $0x18] sm:$0xff]
        %vm687 = vcmask 261120
        %v689 = vsel %vm687, %v679, 0
        %691 = vmatpush.msra.mxu0 0.0
        %692 = vmatpush.msra.mxu0 0.0
        %693 = vmatpush.msra.mxu0 0.0
        %694 = vmatpush.msra.mxu0 0.0
        %695 = vmatpush.msra.mxu0 0.0
        %696 = vmatpush.msra.mxu0 0.0
        %697 = vmatpush.msra.mxu0 0.0
        %698 = vmatpush.msra.mxu0 0.0
        %699 = vmatpush.msra.mxu0 0.0
        %700 = vmatpush.msra.mxu0 0.0
        %701 = vmatpush.msra.mxu0 0.0
        %702 = vmatpush.msra.mxu0 0.0
        %703 = vmatpush.msra.mxu0 %v686
        %704 = vmatpush.msra.mxu0 %v685
        %705 = vmatpush.msra.mxu0 %v684
        %706 = vmatpush.msra.mxu0 %v683
        %707 = vmatmul.f32.gmra.mxu0 %v689
        %v708 = vpop.f32.mrf.mxu0
        %v709 = vadd.f32 0.0, %v708
        %710 = vdwg.mxu0
        %v711 = vld [vmem:[%s5] sm:$0xff]
        %v712 = vld [vmem:[%s5 + $0x8] sm:$0xff]
        %v713 = vld [vmem:[%s5 + $0x10] sm:$0xff]
        %v714 = vld [vmem:[%s5 + $0x18] sm:$0xff]
        %v716 = vsel %vm687, %v680, 0
        %718 = vmatpush.msra.mxu0 0.0
        %719 = vmatpush.msra.mxu0 0.0
        %720 = vmatpush.msra.mxu0 0.0
        %721 = vmatpush.msra.mxu0 0.0
        %722 = vmatpush.msra.mxu0 0.0
        %723 = vmatpush.msra.mxu0 0.0
        %724 = vmatpush.msra.mxu0 0.0
        %725 = vmatpush.msra.mxu0 0.0
        %726 = vmatpush.msra.mxu0 0.0
        %727 = vmatpush.msra.mxu0 0.0
        %728 = vmatpush.msra.mxu0 0.0
        %729 = vmatpush.msra.mxu0 0.0
        %730 = vmatpush.msra.mxu0 %v714
        %731 = vmatpush.msra.mxu0 %v713
        %732 = vmatpush.msra.mxu0 %v712
        %733 = vmatpush.msra.mxu0 %v711
        %734 = vmatmul.f32.gmra.mxu0 %v716
        %v735 = vpop.f32.mrf.mxu0
        %v736 = vadd.f32 0.0, %v735
        %737 = vdwg.mxu0
        %v738 = vld [vmem:[%s6] sm:$0xff]
        %v739 = vld [vmem:[%s6 + $0x8] sm:$0xff]
        %v740 = vld [vmem:[%s6 + $0x10] sm:$0xff]
        %v741 = vld [vmem:[%s6 + $0x18] sm:$0xff]
        %v743 = vsel %vm687, %v681, 0
        %745 = vmatpush.msra.mxu0 0.0
        %746 = vmatpush.msra.mxu0 0.0
        %747 = vmatpush.msra.mxu0 0.0
        %748 = vmatpush.msra.mxu0 0.0
        %749 = vmatpush.msra.mxu0 0.0
        %750 = vmatpush.msra.mxu0 0.0
        %751 = vmatpush.msra.mxu0 0.0
        %752 = vmatpush.msra.mxu0 0.0
        %753 = vmatpush.msra.mxu0 0.0
        %754 = vmatpush.msra.mxu0 0.0
        %755 = vmatpush.msra.mxu0 0.0
        %756 = vmatpush.msra.mxu0 0.0
        %757 = vmatpush.msra.mxu0 %v741
        %758 = vmatpush.msra.mxu0 %v740
        %759 = vmatpush.msra.mxu0 %v739
        %760 = vmatpush.msra.mxu0 %v738
        %761 = vmatmul.f32.gmra.mxu0 %v743
        %v762 = vpop.f32.mrf.mxu0
        %v763 = vadd.f32 0.0, %v762
        %764 = vdwg.mxu0
        %766 = vrot.lane.b32.xlu0 %v709, 120
        %v767 = vpop.permute.xlu0 %766
        %769 = vrot.lane.b32.xlu0 %v709, 112
        %v770 = vpop.permute.xlu0 %769
        %772 = vrot.lane.b32.xlu0 %v709, 104
        %v773 = vpop.permute.xlu0 %772
        %v775 = vrot.slane %v770, 4
        %vm776 = vcmask 1047556
        %v777 = vsel %vm776, %v775, %v709
        %v778 = vrot.slane %v709, 4
        %v779 = vsel %vm776, %v770, %v778
        %v781 = vunpack.c.l.s4 1983009808
        %v782 = vunpack.c.0.s8 %v781
        %v783 = vperm.slane %v777, %v782
        %v785 = vunpack.c.l.s4 1983009808
        %v786 = vunpack.c.0.s8 %v785
        %v787 = vperm.slane %v779, %v786
        %v788 = vrot.slane %v773, 4
        %v789 = vsel %vm776, %v788, %v767
        %v790 = vrot.slane %v767, 4
        %v791 = vsel %vm776, %v773, %v790
        %v793 = vunpack.c.l.s4 1983009808
        %v794 = vunpack.c.0.s8 %v793
        %v795 = vperm.slane %v789, %v794
        %v797 = vunpack.c.l.s4 1983009808
        %v798 = vunpack.c.0.s8 %v797
        %v799 = vperm.slane %v791, %v798
        %v800 = vrot.slane %v795, 4
        %v801 = vsel %vm776, %v800, %v783
        %v802 = vrot.slane %v783, 4
        %v803 = vsel %vm776, %v795, %v802
        %v805 = vunpack.c.l.s4 1934713408
        %v806 = vunpack.c.0.s8 %v805
        %v807 = vperm.slane %v801, %v806
        %v809 = vunpack.c.l.s4 1934713408
        %v810 = vunpack.c.0.s8 %v809
        %v811 = vperm.slane %v803, %v810
        %v812 = vrot.slane %v799, 4
        %v813 = vsel %vm776, %v812, %v787
        %v814 = vrot.slane %v787, 4
        %v815 = vsel %vm776, %v799, %v814
        %v817 = vunpack.c.l.s4 1934713408
        %v818 = vunpack.c.0.s8 %v817
        %v819 = vperm.slane %v813, %v818
        %v821 = vunpack.c.l.s4 1934713408
        %v822 = vunpack.c.0.s8 %v821
        %v823 = vperm.slane %v815, %v822
        %v824 = vrot.slane %v807, 4
        %v825 = vsel %vm776, 0.0, %v824
        %v826 = vrot.slane %v811, 4
        %v827 = vsel %vm776, 0.0, %v826
        %v828 = vrot.slane %v819, 4
        %v829 = vsel %vm776, 0.0, %v828
        %v830 = vrot.slane %v823, 4
        %v831 = vsel %vm776, 0.0, %v830
        %v832 = vsel %vm776, %v826, %v807
        %v834 = vunpack.c.l.s4 1983009808
        %v835 = vunpack.c.0.s8 %v834
        %v836 = vperm.slane %v832, %v835
        %v837 = vrot.slane %v827, 4
        %v838 = vsel %vm776, %v837, %v825
        %v840 = vunpack.c.l.s4 1983009808
        %v841 = vunpack.c.0.s8 %v840
        %v842 = vperm.slane %v838, %v841
        %v843 = vsel %vm776, %v830, %v819
        %v845 = vunpack.c.l.s4 1983009808
        %v846 = vunpack.c.0.s8 %v845
        %v847 = vperm.slane %v843, %v846
        %v848 = vrot.slane %v831, 4
        %v849 = vsel %vm776, %v848, %v829
        %v851 = vunpack.c.l.s4 1983009808
        %v852 = vunpack.c.0.s8 %v851
        %v853 = vperm.slane %v849, %v852
        %v854 = vrot.slane %v842, 4
        %v855 = vsel %vm776, %v854, %v836
        %v856 = vrot.slane %v836, 4
        %v857 = vsel %vm776, %v842, %v856
        %v859 = vunpack.c.l.s4 1934713408
        %v860 = vunpack.c.0.s8 %v859
        %v861 = vperm.slane %v855, %v860
        %v863 = vunpack.c.l.s4 1934713408
        %v864 = vunpack.c.0.s8 %v863
        %v865 = vperm.slane %v857, %v864
        %v866 = vrot.slane %v853, 4
        %v867 = vsel %vm776, %v866, %v847
        %v868 = vrot.slane %v847, 4
        %v869 = vsel %vm776, %v853, %v868
        %v871 = vunpack.c.l.s4 1934713408
        %v872 = vunpack.c.0.s8 %v871
        %v873 = vperm.slane %v867, %v872
        %v875 = vunpack.c.l.s4 1934713408
        %v876 = vunpack.c.0.s8 %v875
        %v877 = vperm.slane %v869, %v876
        %v878 = vrot.slane %v873, 4
        %v879 = vsel %vm776, %v878, %v861
        %v880 = vrot.slane %v861, 4
        %v881 = vsel %vm776, %v873, %v880
        %v882 = vrot.slane %v877, 4
        %v883 = vsel %vm776, %v882, %v865
        %v884 = vrot.slane %v865, 4
        %v885 = vsel %vm776, %v877, %v884
        %887 = vrot.lane.b32.xlu0 %v736, 120
        %v888 = vpop.permute.xlu0 %887
        %890 = vrot.lane.b32.xlu0 %v736, 112
        %v891 = vpop.permute.xlu0 %890
        %893 = vrot.lane.b32.xlu0 %v736, 104
        %v894 = vpop.permute.xlu0 %893
        %v896 = vrot.slane %v891, 4
        %v897 = vsel %vm776, %v896, %v736
        %v898 = vrot.slane %v736, 4
        %v899 = vsel %vm776, %v891, %v898
        %v901 = vunpack.c.l.s4 1983009808
        %v902 = vunpack.c.0.s8 %v901
        %v903 = vperm.slane %v897, %v902
        %v905 = vunpack.c.l.s4 1983009808
        %v906 = vunpack.c.0.s8 %v905
        %v907 = vperm.slane %v899, %v906
        %v908 = vrot.slane %v894, 4
        %v909 = vsel %vm776, %v908, %v888
        %v910 = vrot.slane %v888, 4
        %v911 = vsel %vm776, %v894, %v910
        %v913 = vunpack.c.l.s4 1983009808
        %v914 = vunpack.c.0.s8 %v913
        %v915 = vperm.slane %v909, %v914
        %v917 = vunpack.c.l.s4 1983009808
        %v918 = vunpack.c.0.s8 %v917
        %v919 = vperm.slane %v911, %v918
        %v920 = vrot.slane %v915, 4
        %v921 = vsel %vm776, %v920, %v903
        %v922 = vrot.slane %v903, 4
        %v923 = vsel %vm776, %v915, %v922
        %v925 = vunpack.c.l.s4 1934713408
        %v926 = vunpack.c.0.s8 %v925
        %v927 = vperm.slane %v921, %v926
        %v929 = vunpack.c.l.s4 1934713408
        %v930 = vunpack.c.0.s8 %v929
        %v931 = vperm.slane %v923, %v930
        %v932 = vrot.slane %v919, 4
        %v933 = vsel %vm776, %v932, %v907
        %v934 = vrot.slane %v907, 4
        %v935 = vsel %vm776, %v919, %v934
        %v937 = vunpack.c.l.s4 1934713408
        %v938 = vunpack.c.0.s8 %v937
        %v939 = vperm.slane %v933, %v938
        %v941 = vunpack.c.l.s4 1934713408
        %v942 = vunpack.c.0.s8 %v941
        %v943 = vperm.slane %v935, %v942
        %v944 = vrot.slane %v927, 4
        %v945 = vsel %vm776, 0.0, %v944
        %v946 = vrot.slane %v931, 4
        %v947 = vsel %vm776, 0.0, %v946
        %v948 = vrot.slane %v939, 4
        %v949 = vsel %vm776, 0.0, %v948
        %v950 = vrot.slane %v943, 4
        %v951 = vsel %vm776, 0.0, %v950
        %v952 = vsel %vm776, %v946, %v927
        %v954 = vunpack.c.l.s4 1983009808
        %v955 = vunpack.c.0.s8 %v954
        %v956 = vperm.slane %v952, %v955
        %v957 = vrot.slane %v947, 4
        %v958 = vsel %vm776, %v957, %v945
        %v960 = vunpack.c.l.s4 1983009808
        %v961 = vunpack.c.0.s8 %v960
        %v962 = vperm.slane %v958, %v961
        %v963 = vsel %vm776, %v950, %v939
        %v965 = vunpack.c.l.s4 1983009808
        %v966 = vunpack.c.0.s8 %v965
        %v967 = vperm.slane %v963, %v966
        %v968 = vrot.slane %v951, 4
        %v969 = vsel %vm776, %v968, %v949
        %v971 = vunpack.c.l.s4 1983009808
        %v972 = vunpack.c.0.s8 %v971
        %v973 = vperm.slane %v969, %v972
        %v974 = vrot.slane %v962, 4
        %v975 = vsel %vm776, %v974, %v956
        %v976 = vrot.slane %v956, 4
        %v977 = vsel %vm776, %v962, %v976
        %v979 = vunpack.c.l.s4 1934713408
        %v980 = vunpack.c.0.s8 %v979
        %v981 = vperm.slane %v975, %v980
        %v983 = vunpack.c.l.s4 1934713408
        %v984 = vunpack.c.0.s8 %v983
        %v985 = vperm.slane %v977, %v984
        %v986 = vrot.slane %v973, 4
        %v987 = vsel %vm776, %v986, %v967
        %v988 = vrot.slane %v967, 4
        %v989 = vsel %vm776, %v973, %v988
        %v991 = vunpack.c.l.s4 1934713408
        %v992 = vunpack.c.0.s8 %v991
        %v993 = vperm.slane %v987, %v992
        %v995 = vunpack.c.l.s4 1934713408
        %v996 = vunpack.c.0.s8 %v995
        %v997 = vperm.slane %v989, %v996
        %v998 = vrot.slane %v993, 4
        %v999 = vsel %vm776, %v998, %v981
        %v1000 = vrot.slane %v981, 4
        %v1001 = vsel %vm776, %v993, %v1000
        %v1002 = vrot.slane %v997, 4
        %v1003 = vsel %vm776, %v1002, %v985
        %v1004 = vrot.slane %v985, 4
        %v1005 = vsel %vm776, %v997, %v1004
        %1007 = vrot.lane.b32.xlu0 %v763, 120
        %v1008 = vpop.permute.xlu0 %1007
        %1010 = vrot.lane.b32.xlu0 %v763, 112
        %v1011 = vpop.permute.xlu0 %1010
        %1013 = vrot.lane.b32.xlu0 %v763, 104
        %v1014 = vpop.permute.xlu0 %1013
        %v1016 = vrot.slane %v1011, 4
        %v1017 = vsel %vm776, %v1016, %v763
        %v1018 = vrot.slane %v763, 4
        %v1019 = vsel %vm776, %v1011, %v1018
        %v1021 = vunpack.c.l.s4 1983009808
        %v1022 = vunpack.c.0.s8 %v1021
        %v1023 = vperm.slane %v1017, %v1022
        %v1025 = vunpack.c.l.s4 1983009808
        %v1026 = vunpack.c.0.s8 %v1025
        %v1027 = vperm.slane %v1019, %v1026
        %v1028 = vrot.slane %v1014, 4
        %v1029 = vsel %vm776, %v1028, %v1008
        %v1030 = vrot.slane %v1008, 4
        %v1031 = vsel %vm776, %v1014, %v1030
        %v1033 = vunpack.c.l.s4 1983009808
        %v1034 = vunpack.c.0.s8 %v1033
        %v1035 = vperm.slane %v1029, %v1034
        %v1037 = vunpack.c.l.s4 1983009808
        %v1038 = vunpack.c.0.s8 %v1037
        %v1039 = vperm.slane %v1031, %v1038
        %v1040 = vrot.slane %v1035, 4
        %v1041 = vsel %vm776, %v1040, %v1023
        %v1042 = vrot.slane %v1023, 4
        %v1043 = vsel %vm776, %v1035, %v1042
        %v1045 = vunpack.c.l.s4 1934713408
        %v1046 = vunpack.c.0.s8 %v1045
        %v1047 = vperm.slane %v1041, %v1046
        %v1049 = vunpack.c.l.s4 1934713408
        %v1050 = vunpack.c.0.s8 %v1049
        %v1051 = vperm.slane %v1043, %v1050
        %v1052 = vrot.slane %v1039, 4
        %v1053 = vsel %vm776, %v1052, %v1027
        %v1054 = vrot.slane %v1027, 4
        %v1055 = vsel %vm776, %v1039, %v1054
        %v1057 = vunpack.c.l.s4 1934713408
        %v1058 = vunpack.c.0.s8 %v1057
        %v1059 = vperm.slane %v1053, %v1058
        %v1061 = vunpack.c.l.s4 1934713408
        %v1062 = vunpack.c.0.s8 %v1061
        %v1063 = vperm.slane %v1055, %v1062
        %v1064 = vrot.slane %v1047, 4
        %v1065 = vsel %vm776, 0.0, %v1064
        %v1066 = vrot.slane %v1051, 4
        %v1067 = vsel %vm776, 0.0, %v1066
        %v1068 = vrot.slane %v1059, 4
        %v1069 = vsel %vm776, 0.0, %v1068
        %v1070 = vrot.slane %v1063, 4
        %v1071 = vsel %vm776, 0.0, %v1070
        %v1072 = vsel %vm776, %v1066, %v1047
        %v1074 = vunpack.c.l.s4 1983009808
        %v1075 = vunpack.c.0.s8 %v1074
        %v1076 = vperm.slane %v1072, %v1075
        %v1077 = vrot.slane %v1067, 4
        %v1078 = vsel %vm776, %v1077, %v1065
        %v1080 = vunpack.c.l.s4 1983009808
        %v1081 = vunpack.c.0.s8 %v1080
        %v1082 = vperm.slane %v1078, %v1081
        %v1083 = vsel %vm776, %v1070, %v1059
        %v1085 = vunpack.c.l.s4 1983009808
        %v1086 = vunpack.c.0.s8 %v1085
        %v1087 = vperm.slane %v1083, %v1086
        %v1088 = vrot.slane %v1071, 4
        %v1089 = vsel %vm776, %v1088, %v1069
        %v1091 = vunpack.c.l.s4 1983009808
        %v1092 = vunpack.c.0.s8 %v1091
        %v1093 = vperm.slane %v1089, %v1092
        %v1094 = vrot.slane %v1082, 4
        %v1095 = vsel %vm776, %v1094, %v1076
        %v1096 = vrot.slane %v1076, 4
        %v1097 = vsel %vm776, %v1082, %v1096
        %v1099 = vunpack.c.l.s4 1934713408
        %v1100 = vunpack.c.0.s8 %v1099
        %v1101 = vperm.slane %v1095, %v1100
        %v1103 = vunpack.c.l.s4 1934713408
        %v1104 = vunpack.c.0.s8 %v1103
        %v1105 = vperm.slane %v1097, %v1104
        %v1106 = vrot.slane %v1093, 4
        %v1107 = vsel %vm776, %v1106, %v1087
        %v1108 = vrot.slane %v1087, 4
        %v1109 = vsel %vm776, %v1093, %v1108
        %v1111 = vunpack.c.l.s4 1934713408
        %v1112 = vunpack.c.0.s8 %v1111
        %v1113 = vperm.slane %v1107, %v1112
        %v1115 = vunpack.c.l.s4 1934713408
        %v1116 = vunpack.c.0.s8 %v1115
        %v1117 = vperm.slane %v1109, %v1116
        %v1118 = vrot.slane %v1113, 4
        %v1119 = vsel %vm776, %v1118, %v1101
        %v1120 = vrot.slane %v1101, 4
        %v1121 = vsel %vm776, %v1113, %v1120
        %v1122 = vrot.slane %v1117, 4
        %v1123 = vsel %vm776, %v1122, %v1105
        %v1124 = vrot.slane %v1105, 4
        %v1125 = vsel %vm776, %v1117, %v1124
        %vm1126 = vcmask 64512
        %v1128 = vsel %vm1126, %v1119, 0
        %v1131 = vsel %vm1126, %v999, 0
        %1133 = vmatpush.xpose.msra.mxu0 0.0
        %1134 = vmatpush.xpose.msra.mxu0 0.0
        %1135 = vmatpush.xpose.msra.mxu0 0.0
        %1136 = vmatpush.xpose.msra.mxu0 0.0
        %1137 = vmatpush.xpose.msra.mxu0 0.0
        %1138 = vmatpush.xpose.msra.mxu0 0.0
        %1139 = vmatpush.xpose.msra.mxu0 0.0
        %1140 = vmatpush.xpose.msra.mxu0 0.0
        %1141 = vmatpush.xpose.msra.mxu0 0.0
        %1142 = vmatpush.xpose.msra.mxu0 0.0
        %1143 = vmatpush.xpose.msra.mxu0 0.0
        %1144 = vmatpush.xpose.msra.mxu0 0.0
        %1145 = vmatpush.xpose.msra.mxu0 0.0
        %1146 = vmatpush.xpose.msra.mxu0 0.0
        %1147 = vmatpush.xpose.msra.mxu0 0.0
        %1148 = vmatpush.xpose.msra.mxu0 %v1131
        %1149 = vmatmul.f32.gmra.mxu0 %v1128
        %v1150 = vpop.f32.mrf.mxu0
        %v1151 = vadd.f32 0.0, %v1150
        %1152 = vdwg.mxu0
        %v1154 = vsel %vm1126, %v1121, 0
        %v1157 = vsel %vm1126, %v1001, 0
        %1159 = vmatpush.xpose.msra.mxu0 0.0
        %1160 = vmatpush.xpose.msra.mxu0 0.0
        %1161 = vmatpush.xpose.msra.mxu0 0.0
        %1162 = vmatpush.xpose.msra.mxu0 0.0
        %1163 = vmatpush.xpose.msra.mxu0 0.0
        %1164 = vmatpush.xpose.msra.mxu0 0.0
        %1165 = vmatpush.xpose.msra.mxu0 0.0
        %1166 = vmatpush.xpose.msra.mxu0 0.0
        %1167 = vmatpush.xpose.msra.mxu0 0.0
        %1168 = vmatpush.xpose.msra.mxu0 0.0
        %1169 = vmatpush.xpose.msra.mxu0 0.0
        %1170 = vmatpush.xpose.msra.mxu0 0.0
        %1171 = vmatpush.xpose.msra.mxu0 0.0
        %1172 = vmatpush.xpose.msra.mxu0 0.0
        %1173 = vmatpush.xpose.msra.mxu0 0.0
        %1174 = vmatpush.xpose.msra.mxu0 %v1157
        %1175 = vmatmul.f32.gmra.mxu0 %v1154
        %v1176 = vpop.f32.mrf.mxu0
        %v1177 = vadd.f32 0.0, %v1176
        %1178 = vdwg.mxu0
        %v1180 = vsel %vm1126, %v1123, 0
        %v1183 = vsel %vm1126, %v1003, 0
        %1185 = vmatpush.xpose.msra.mxu0 0.0
        %1186 = vmatpush.xpose.msra.mxu0 0.0
        %1187 = vmatpush.xpose.msra.mxu0 0.0
        %1188 = vmatpush.xpose.msra.mxu0 0.0
        %1189 = vmatpush.xpose.msra.mxu0 0.0
        %1190 = vmatpush.xpose.msra.mxu0 0.0
        %1191 = vmatpush.xpose.msra.mxu0 0.0
        %1192 = vmatpush.xpose.msra.mxu0 0.0
        %1193 = vmatpush.xpose.msra.mxu0 0.0
        %1194 = vmatpush.xpose.msra.mxu0 0.0
        %1195 = vmatpush.xpose.msra.mxu0 0.0
        %1196 = vmatpush.xpose.msra.mxu0 0.0
        %1197 = vmatpush.xpose.msra.mxu0 0.0
        %1198 = vmatpush.xpose.msra.mxu0 0.0
        %1199 = vmatpush.xpose.msra.mxu0 0.0
        %1200 = vmatpush.xpose.msra.mxu0 %v1183
        %1201 = vmatmul.f32.gmra.mxu0 %v1180
        %v1202 = vpop.f32.mrf.mxu0
        %v1203 = vadd.f32 0.0, %v1202
        %1204 = vdwg.mxu0
        %v1206 = vsel %vm1126, %v1125, 0
        %v1209 = vsel %vm1126, %v1005, 0
        %1211 = vmatpush.xpose.msra.mxu0 0.0
        %1212 = vmatpush.xpose.msra.mxu0 0.0
        %1213 = vmatpush.xpose.msra.mxu0 0.0
        %1214 = vmatpush.xpose.msra.mxu0 0.0
        %1215 = vmatpush.xpose.msra.mxu0 0.0
        %1216 = vmatpush.xpose.msra.mxu0 0.0
        %1217 = vmatpush.xpose.msra.mxu0 0.0
        %1218 = vmatpush.xpose.msra.mxu0 0.0
        %1219 = vmatpush.xpose.msra.mxu0 0.0
        %1220 = vmatpush.xpose.msra.mxu0 0.0
        %1221 = vmatpush.xpose.msra.mxu0 0.0
        %1222 = vmatpush.xpose.msra.mxu0 0.0
        %1223 = vmatpush.xpose.msra.mxu0 0.0
        %1224 = vmatpush.xpose.msra.mxu0 0.0
        %1225 = vmatpush.xpose.msra.mxu0 0.0
        %1226 = vmatpush.xpose.msra.mxu0 %v1209
        %1227 = vmatmul.f32.gmra.mxu0 %v1206
        %v1228 = vpop.f32.mrf.mxu0
        %v1229 = vadd.f32 0.0, %v1228
        %1230 = vdwg.mxu0
        %vm1231 = vcmp.eq.f32.partialorder %v682, 0.0
        %v1232 = vsel %vm1231, 1, 0
        %vm1233 = vcmp.eq.s32.totalorder %v1232, 1
        %v1234 = vsel %vm1233, -1e+20, %v1151
        %v1235 = vsel %vm1233, -1e+20, %v1177
        %v1236 = vsel %vm1233, -1e+20, %v1203
        %v1237 = vsel %vm1233, -1e+20, %v1229
        %v1238 = vsel %vm1126, %v1234, -inf
        %1239 = vmax.xlane.f32.xlu0 %v1238
        %v1240 = vpop.xlane.xlu0 %1239
        %v1241 = vsel %vm1126, %v1235, -inf
        %1242 = vmax.xlane.f32.xlu0 %v1241
        %v1243 = vpop.xlane.xlu0 %1242
        %v1244 = vsel %vm1126, %v1236, -inf
        %1245 = vmax.xlane.f32.xlu0 %v1244
        %v1246 = vpop.xlane.xlu0 %1245
        %v1247 = vsel %vm1126, %v1237, -inf
        %1248 = vmax.xlane.f32.xlu0 %v1247
        %v1249 = vpop.xlane.xlu0 %1248
        %v1250 = vsub.f32 %v1234, %v1240
        %v1251 = vsub.f32 %v1235, %v1243
        %v1252 = vsub.f32 %v1236, %v1246
        %v1253 = vsub.f32 %v1237, %v1249
        %v1254 = vmul.f32 %v1250, 1.442695
        %v1255 = vpow.pop %v1254
        %v1256 = vmul.f32 %v1251, 1.442695
        %v1257 = vpow.pop %v1256
        %v1258 = vmul.f32 %v1252, 1.442695
        %v1259 = vpow.pop %v1258
        %v1260 = vmul.f32 %v1253, 1.442695
        %v1261 = vpow.pop %v1260
        %v1262 = vsel %vm1126, %v1255, 0.0
        %1263 = vadd.xlane.f32.xlu0 %v1262
        %v1264 = vpop.xlane.xlu0 %1263
        %v1265 = vsel %vm1126, %v1257, 0.0
        %1266 = vadd.xlane.f32.xlu0 %v1265
        %v1267 = vpop.xlane.xlu0 %1266
        %v1268 = vsel %vm1126, %v1259, 0.0
        %1269 = vadd.xlane.f32.xlu0 %v1268
        %v1270 = vpop.xlane.xlu0 %1269
        %v1271 = vsel %vm1126, %v1261, 0.0
        %1272 = vadd.xlane.f32.xlu0 %v1271
        %v1273 = vpop.xlane.xlu0 %1272
        %v1274 = vrcp.pop %v1264
        %v1275 = vrcp.pop %v1267
        %v1276 = vrcp.pop %v1270
        %v1277 = vrcp.pop %v1273
        %v1278 = vmul.f32 %v1255, %v1274
        %v1279 = vmul.f32 %v1257, %v1275
        %v1280 = vmul.f32 %v1259, %v1276
        %v1281 = vmul.f32 %v1261, %v1277
        %v1283 = vsel %vm1126, %v1278, 0
        %1285 = vmatpush.msra.mxu0 0.0
        %1286 = vmatpush.msra.mxu0 0.0
        %1287 = vmatpush.msra.mxu0 0.0
        %1288 = vmatpush.msra.mxu0 0.0
        %1289 = vmatpush.msra.mxu0 0.0
        %1290 = vmatpush.msra.mxu0 0.0
        %1291 = vmatpush.msra.mxu0 0.0
        %1292 = vmatpush.msra.mxu0 0.0
        %1293 = vmatpush.msra.mxu0 0.0
        %1294 = vmatpush.msra.mxu0 0.0
        %1295 = vmatpush.msra.mxu0 0.0
        %1296 = vmatpush.msra.mxu0 0.0
        %1297 = vmatpush.msra.mxu0 0.0
        %1298 = vmatpush.msra.mxu0 0.0
        %1299 = vmatpush.msra.mxu0 0.0
        %1300 = vmatpush.msra.mxu0 %v879
        %1301 = vmatmul.f32.gmra.mxu0 %v1283
        %v1302 = vpop.f32.mrf.mxu0
        %v1303 = vadd.f32 0.0, %v1302
        %1304 = vdwg.mxu0
        %v1306 = vsel %vm1126, %v1279, 0
        %1308 = vmatpush.msra.mxu0 0.0
        %1309 = vmatpush.msra.mxu0 0.0
        %1310 = vmatpush.msra.mxu0 0.0
        %1311 = vmatpush.msra.mxu0 0.0
        %1312 = vmatpush.msra.mxu0 0.0
        %1313 = vmatpush.msra.mxu0 0.0
        %1314 = vmatpush.msra.mxu0 0.0
        %1315 = vmatpush.msra.mxu0 0.0
        %1316 = vmatpush.msra.mxu0 0.0
        %1317 = vmatpush.msra.mxu0 0.0
        %1318 = vmatpush.msra.mxu0 0.0
        %1319 = vmatpush.msra.mxu0 0.0
        %1320 = vmatpush.msra.mxu0 0.0
        %1321 = vmatpush.msra.mxu0 0.0
        %1322 = vmatpush.msra.mxu0 0.0
        %1323 = vmatpush.msra.mxu0 %v881
        %1324 = vmatmul.f32.gmra.mxu0 %v1306
        %v1325 = vpop.f32.mrf.mxu0
        %v1326 = vadd.f32 0.0, %v1325
        %1327 = vdwg.mxu0
        %v1329 = vsel %vm1126, %v1280, 0
        %1331 = vmatpush.msra.mxu0 0.0
        %1332 = vmatpush.msra.mxu0 0.0
        %1333 = vmatpush.msra.mxu0 0.0
        %1334 = vmatpush.msra.mxu0 0.0
        %1335 = vmatpush.msra.mxu0 0.0
        %1336 = vmatpush.msra.mxu0 0.0
        %1337 = vmatpush.msra.mxu0 0.0
        %1338 = vmatpush.msra.mxu0 0.0
        %1339 = vmatpush.msra.mxu0 0.0
        %1340 = vmatpush.msra.mxu0 0.0
        %1341 = vmatpush.msra.mxu0 0.0
        %1342 = vmatpush.msra.mxu0 0.0
        %1343 = vmatpush.msra.mxu0 0.0
        %1344 = vmatpush.msra.mxu0 0.0
        %1345 = vmatpush.msra.mxu0 0.0
        %1346 = vmatpush.msra.mxu0 %v883
        %1347 = vmatmul.f32.gmra.mxu0 %v1329
        %v1348 = vpop.f32.mrf.mxu0
        %v1349 = vadd.f32 0.0, %v1348
        %1350 = vdwg.mxu0
        %v1352 = vsel %vm1126, %v1281, 0
        %1354 = vmatpush.msra.mxu0 0.0
        %1355 = vmatpush.msra.mxu0 0.0
        %1356 = vmatpush.msra.mxu0 0.0
        %1357 = vmatpush.msra.mxu0 0.0
        %1358 = vmatpush.msra.mxu0 0.0
        %1359 = vmatpush.msra.mxu0 0.0
        %1360 = vmatpush.msra.mxu0 0.0
        %1361 = vmatpush.msra.mxu0 0.0
        %1362 = vmatpush.msra.mxu0 0.0
        %1363 = vmatpush.msra.mxu0 0.0
        %1364 = vmatpush.msra.mxu0 0.0
        %1365 = vmatpush.msra.mxu0 0.0
        %1366 = vmatpush.msra.mxu0 0.0
        %1367 = vmatpush.msra.mxu0 0.0
        %1368 = vmatpush.msra.mxu0 0.0
        %1369 = vmatpush.msra.mxu0 %v885
        %1370 = vmatmul.f32.gmra.mxu0 %v1352
        %v1371 = vpop.f32.mrf.mxu0
        %v1372 = vadd.f32 0.0, %v1371
        %1373 = vdwg.mxu0
        %v1374 = vrot.slane %v1349, 4
        %v1375 = vsel %vm776, %v1374, %v1303
        %v1376 = vrot.slane %v1303, 4
        %v1377 = vsel %vm776, %v1349, %v1376
        %v1379 = vunpack.c.l.s4 1983009808
        %v1380 = vunpack.c.0.s8 %v1379
        %v1381 = vperm.slane %v1375, %v1380
        %v1383 = vunpack.c.l.s4 1983009808
        %v1384 = vunpack.c.0.s8 %v1383
        %v1385 = vperm.slane %v1377, %v1384
        %v1386 = vrot.slane %v1372, 4
        %v1387 = vsel %vm776, %v1386, %v1326
        %v1388 = vrot.slane %v1326, 4
        %v1389 = vsel %vm776, %v1372, %v1388
        %v1391 = vunpack.c.l.s4 1983009808
        %v1392 = vunpack.c.0.s8 %v1391
        %v1393 = vperm.slane %v1387, %v1392
        %v1395 = vunpack.c.l.s4 1983009808
        %v1396 = vunpack.c.0.s8 %v1395
        %v1397 = vperm.slane %v1389, %v1396
        %v1398 = vrot.slane %v1393, 4
        %v1399 = vsel %vm776, %v1398, %v1381
        %v1400 = vrot.slane %v1381, 4
        %v1401 = vsel %vm776, %v1393, %v1400
        %v1403 = vunpack.c.l.s4 1934713408
        %v1404 = vunpack.c.0.s8 %v1403
        %v1405 = vperm.slane %v1399, %v1404
        %v1407 = vunpack.c.l.s4 1934713408
        %v1408 = vunpack.c.0.s8 %v1407
        %v1409 = vperm.slane %v1401, %v1408
        %v1410 = vrot.slane %v1397, 4
        %v1411 = vsel %vm776, %v1410, %v1385
        %v1412 = vrot.slane %v1385, 4
        %v1413 = vsel %vm776, %v1397, %v1412
        %v1415 = vunpack.c.l.s4 1934713408
        %v1416 = vunpack.c.0.s8 %v1415
        %v1417 = vperm.slane %v1411, %v1416
        %v1419 = vunpack.c.l.s4 1934713408
        %v1420 = vunpack.c.0.s8 %v1419
        %v1421 = vperm.slane %v1413, %v1420
        %v1422 = vrot.slane %v1405, 4
        %v1423 = vsel %vm776, 0.0, %v1422
        %v1424 = vrot.slane %v1409, 4
        %v1425 = vsel %vm776, 0.0, %v1424
        %v1426 = vrot.slane %v1417, 4
        %v1427 = vsel %vm776, 0.0, %v1426
        %v1428 = vrot.slane %v1421, 4
        %v1429 = vsel %vm776, 0.0, %v1428
        %v1430 = vsel %vm776, %v1424, %v1405
        %v1432 = vunpack.c.l.s4 1983009808
        %v1433 = vunpack.c.0.s8 %v1432
        %v1434 = vperm.slane %v1430, %v1433
        %v1435 = vrot.slane %v1425, 4
        %v1436 = vsel %vm776, %v1435, %v1423
        %v1438 = vunpack.c.l.s4 1983009808
        %v1439 = vunpack.c.0.s8 %v1438
        %v1440 = vperm.slane %v1436, %v1439
        %v1441 = vsel %vm776, %v1428, %v1417
        %v1443 = vunpack.c.l.s4 1983009808
        %v1444 = vunpack.c.0.s8 %v1443
        %v1445 = vperm.slane %v1441, %v1444
        %v1446 = vrot.slane %v1429, 4
        %v1447 = vsel %vm776, %v1446, %v1427
        %v1449 = vunpack.c.l.s4 1983009808
        %v1450 = vunpack.c.0.s8 %v1449
        %v1451 = vperm.slane %v1447, %v1450
        %v1452 = vrot.slane %v1440, 4
        %v1453 = vsel %vm776, %v1452, %v1434
        %v1454 = vrot.slane %v1434, 4
        %v1455 = vsel %vm776, %v1440, %v1454
        %v1457 = vunpack.c.l.s4 1934713408
        %v1458 = vunpack.c.0.s8 %v1457
        %v1459 = vperm.slane %v1453, %v1458
        %v1461 = vunpack.c.l.s4 1934713408
        %v1462 = vunpack.c.0.s8 %v1461
        %v1463 = vperm.slane %v1455, %v1462
        %v1464 = vrot.slane %v1451, 4
        %v1465 = vsel %vm776, %v1464, %v1445
        %v1466 = vrot.slane %v1445, 4
        %v1467 = vsel %vm776, %v1451, %v1466
        %v1469 = vunpack.c.l.s4 1934713408
        %v1470 = vunpack.c.0.s8 %v1469
        %v1471 = vperm.slane %v1465, %v1470
        %v1473 = vunpack.c.l.s4 1934713408
        %v1474 = vunpack.c.0.s8 %v1473
        %v1475 = vperm.slane %v1467, %v1474
        %v1476 = vrot.slane %v1471, 4
        %v1477 = vsel %vm776, %v1476, %v1459
        %v1478 = vrot.slane %v1459, 4
        %v1479 = vsel %vm776, %v1471, %v1478
        %v1480 = vrot.slane %v1475, 4
        %v1481 = vsel %vm776, %v1480, %v1463
        %v1482 = vrot.slane %v1463, 4
        %v1483 = vsel %vm776, %v1475, %v1482
        %1485 = vrot.lane.b32.xlu0 %v1479, 8
        %v1486 = vpop.permute.xlu0 %1485
        %1489 = vrot.lane.b32.xlu0 %v1481, 16
        %v1490 = vpop.permute.xlu0 %1489
        %1493 = vrot.lane.b32.xlu0 %v1483, 24
        %v1494 = vpop.permute.xlu0 %1493
        %v1496 = vsel %vm1126, %v1477, %v1486
        %vm1497 = vcmask 130048
        %v1498 = vsel %vm1497, %v1496, %v1490
        %vm1499 = vcmask 195584
        %v1500 = vsel %vm1499, %v1498, %v1494
        %v1501 = vld [vmem:[#allocation10] sm:$0xff]
        %v1502 = vld [vmem:[#allocation10 + $0x8] sm:$0xff]
        %v1503 = vld [vmem:[#allocation10 + $0x10] sm:$0xff]
        %v1504 = vld [vmem:[#allocation10 + $0x18] sm:$0xff]
        %v1505 = vld [vmem:[%s8] sm:$0x1]
        %v1507 = vperm.slane %v1505, 0
        %v1510 = vsel %vm687, %v1500, 0
        %1512 = vmatpush.msra.mxu0 0.0
        %1513 = vmatpush.msra.mxu0 0.0
        %1514 = vmatpush.msra.mxu0 0.0
        %1515 = vmatpush.msra.mxu0 0.0
        %1516 = vmatpush.msra.mxu0 0.0
        %1517 = vmatpush.msra.mxu0 0.0
        %1518 = vmatpush.msra.mxu0 0.0
        %1519 = vmatpush.msra.mxu0 0.0
        %1520 = vmatpush.msra.mxu0 0.0
        %1521 = vmatpush.msra.mxu0 0.0
        %1522 = vmatpush.msra.mxu0 0.0
        %1523 = vmatpush.msra.mxu0 0.0
        %1524 = vmatpush.msra.mxu0 %v1504
        %1525 = vmatpush.msra.mxu0 %v1503
        %1526 = vmatpush.msra.mxu0 %v1502
        %1527 = vmatpush.msra.mxu0 %v1501
        %1528 = vmatmul.f32.gmra.mxu0 %v1510
        %v1529 = vpop.f32.mrf.mxu0
        %v1530 = vadd.f32 %v1507, %v1529
        %1531 = vdwg.mxu0
        %v1532 = vld [vmem:[#allocation11] sm:$0xff]
        %v1533 = vld [vmem:[#allocation11 + $0x8] sm:$0xff]
        %v1534 = vld [vmem:[#allocation11 + $0x10] sm:$0xff]
        %v1535 = vld [vmem:[#allocation11 + $0x18] sm:$0xff]
        %v1536 = vld [vmem:[%s10] sm:$0x1]
        %v1538 = vperm.slane %v1536, 0
        %v1541 = vsel %vm687, %v1530, 0
        %1543 = vmatpush.msra.mxu0 0.0
        %1544 = vmatpush.msra.mxu0 0.0
        %1545 = vmatpush.msra.mxu0 0.0
        %1546 = vmatpush.msra.mxu0 0.0
        %1547 = vmatpush.msra.mxu0 0.0
        %1548 = vmatpush.msra.mxu0 0.0
        %1549 = vmatpush.msra.mxu0 0.0
        %1550 = vmatpush.msra.mxu0 0.0
        %1551 = vmatpush.msra.mxu0 0.0
        %1552 = vmatpush.msra.mxu0 0.0
        %1553 = vmatpush.msra.mxu0 0.0
        %1554 = vmatpush.msra.mxu0 0.0
        %1555 = vmatpush.msra.mxu0 %v1535
        %1556 = vmatpush.msra.mxu0 %v1534
        %1557 = vmatpush.msra.mxu0 %v1533
        %1558 = vmatpush.msra.mxu0 %v1532
        %1559 = vmatmul.f32.gmra.mxu0 %v1541
        %v1560 = vpop.f32.mrf.mxu0
        %v1561 = vadd.f32 %v1538, %v1560
        %1562 = vdwg.mxu0
        %v1563 = vmax.f32 %v1561, 0.0
        %v1564 = vld [vmem:[%s11] sm:$0xff]
        %v1565 = vld [vmem:[%s11 + $0x8] sm:$0xff]
        %v1566 = vld [vmem:[%s11 + $0x10] sm:$0xff]
        %v1567 = vld [vmem:[%s11 + $0x18] sm:$0xff]
        %v1568 = vld [vmem:[%s11 + $0x20] sm:$0xff]
        %v1569 = vld [vmem:[%s11 + $0x28] sm:$0xff]
        %v1570 = vld [vmem:[%s11 + $0x30] sm:$0xff]
        %v1571 = vld [vmem:[%s11 + $0x38] sm:$0xff]
        %v1572 = vld [vmem:[%s12] sm:$0x1]
        %v1574 = vperm.slane %v1572, 0
        %vm1576 = vcmask 523264
        %v1578 = vsel %vm1576, %v1563, 0
        %1580 = vmatpush.msra.mxu0 0.0
        %1581 = vmatpush.msra.mxu0 0.0
        %1582 = vmatpush.msra.mxu0 0.0
        %1583 = vmatpush.msra.mxu0 0.0
        %1584 = vmatpush.msra.mxu0 0.0
        %1585 = vmatpush.msra.mxu0 0.0
        %1586 = vmatpush.msra.mxu0 0.0
        %1587 = vmatpush.msra.mxu0 0.0
        %1588 = vmatpush.msra.mxu0 %v1571
        %1589 = vmatpush.msra.mxu0 %v1570
        %1590 = vmatpush.msra.mxu0 %v1569
        %1591 = vmatpush.msra.mxu0 %v1568
        %1592 = vmatpush.msra.mxu0 %v1567
        %1593 = vmatpush.msra.mxu0 %v1566
        %1594 = vmatpush.msra.mxu0 %v1565
        %1595 = vmatpush.msra.mxu0 %v1564
        %1596 = vmatmul.f32.gmra.mxu0 %v1578
        %v1597 = vpop.f32.mrf.mxu0
        %v1598 = vadd.f32 %v1574, %v1597
        %1599 = vdwg.mxu0
        %v1600 = vadd.f32 %v1598, %v1530
        %v1601 = vsel %vm687, %v1600, 0.0
        %1602 = vadd.xlane.f32.xlu0 %v1601
        %v1603 = vpop.xlane.xlu0 %1602
        %v1604 = vrcp.pop 32.0
        %v1605 = vmul.f32 32.0, %v1604
        %v1606 = vsub.f32 1.0, %v1605
        %v1607 = vmul.f32 %v1604, %v1606
        %v1608 = vadd.f32 %v1604, %v1607
        %vm1609 = vweird.f32 %v1604
        %v1610 = vsel %vm1609, %v1604, %v1608
        %v1611 = vmul.f32 %v1603, %v1610
        %v1612 = vsub.f32 %v1600, %v1611
        %v1613 = vmul.f32 %v1612, %v1612
        %v1614 = vsel %vm687, %v1613, 0.0
        %1615 = vadd.xlane.f32.xlu0 %v1614
        %v1616 = vpop.xlane.xlu0 %1615
        %v1617 = vmul.f32 %v1616, %v1610
        %v1618 = vadd.f32 %v1617, 1e-05
        %v1619 = vrsqrt.pop %v1618
        %v1620 = vmul.f32 %v1619, %v1618
        %v1621 = vmul.f32 %v1620, %v1619
        %v1622 = vmul.f32 0.5, %v1621
        %v1623 = vsub.f32 1.5, %v1622
        %v1624 = vmul.f32 %v1619, %v1623
        %vm1625 = vweird.f32 %v1618
        %vm1626 = vweird.f32 %v1619
        %vm1627 = vmor %vm1625, %vm1626
        %v1628 = vsel %vm1627, %v1619, %v1624
        %v1629 = vmul.f32 %v1612, %v1628
        %v1630 = vld [vmem:[%s13] sm:$0x1]
        %v1632 = vperm.slane %v1630, 0
        %v1634 = vmul.f32 %v1629, %v1632
        %v1635 = vld [vmem:[%s14] sm:$0x1]
        %v1637 = vperm.slane %v1635, 0
        %v1639 = vadd.f32 %v1634, %v1637
        %1640 = vst.msk [vmem:[%s678] sm:$0xff] %vm687, %v1639
        %s1641 = sand.u32 %s400, 1
        %s1642 = scalar_lea.sflag [#allocation4], %s1641
        %s1643 = sand.u32 %s400, 1
        %s1644 = smul.addr %s1643, 8
        %s1645 = scalar_lea.vmem [#allocation13], %s1644
        // Predicated region
        $region105: #{tpu_custom_call.1} parent=79 // pred_check
          %p1646 = pneg %p410
        $region106: #{tpu_custom_call.1} parent=79 // pred_check_branch
          %1648 = sbr.rel (%p1646) target = $region108
        $region107: #{tpu_custom_call.1} parent=79 // pred_region
          %1650 = vsyncadd %s1642, 0
          %s1651 = sadd.s32 %s44, %s43
          %s1652 = smul.addr %s1651, 8
          %s1653 = scalar_lea.hbm %s15, %s1652
          %s1655 = sshll.u32 %s1645, 4
          %s1656 = int_to_ptr.vmem [resolvable:$true] %s1655
          %s1657 = sshll.u32 %s1653, 4
          %s1658 = int_to_ptr.hbm [resolvable:$true] %s1657
          %1660 = dma.vmem_to_hbm [thread:$0]  %s1656, 128, %s1658, %s1642
        $region108: #{tpu_custom_call.1} parent=79 // pred_fallthru
          _
      $region80: #{tpu_custom_call.1} parent=5 // pred_fallthru
        _
      %p1661 = scmp.le.s32.totalorder 2, %s34
      // Predicated region
      $region109: #{tpu_custom_call.1} parent=5 // pred_check
        %p1662 = pneg %p1661
      $region110: #{tpu_custom_call.1} parent=5 // pred_check_branch
        %1664 = sbr.rel (%p1662) target = $region112
      $region111: #{tpu_custom_call.1} parent=5 // pred_region
        %s1665 = ssub.s32 %s34, 2
        // Predicated region
        $region113: #{tpu_custom_call.1} parent=111 // pred_check
          %p1666 = pneg %p416
        $region114: #{tpu_custom_call.1} parent=111 // pred_check_branch
          %1668 = sbr.rel (%p1666) target = $region116
        $region115: #{tpu_custom_call.1} parent=111 // pred_region
          %s1669 = sand.u32 %s401, 1
          %s1670 = scalar_lea.sflag [#allocation4], %s1669
          %s1671 = sand.u32 %s401, 1
          %s1672 = smul.addr %s1671, 8
          %s1673 = scalar_lea.vmem [#allocation13], %s1672
          %1675 = dma.done %s1670, 128
        $region116: #{tpu_custom_call.1} parent=111 // pred_fallthru
          _
      $region112: #{tpu_custom_call.1} parent=5 // pred_fallthru
        _
    $region6: #{tpu_custom_call.1} parent=1 // loop_footer
      %s38 = sadd.s32 1, %s34
    $region7: #{tpu_custom_call.1} parent=1 // loop_footer_branch
      %33 = sbr.rel target = $region3
    $region8: #{tpu_custom_call.1} parent=1 // loop_exit
      _
    %1676 = vsyncpa [#allocation3], 1
    %s1677 = scalar_lea.sflag [#allocation3], 1
    %1678 = vsyncpa %s1677, 1
    %1679 = vsyncpa [#allocation6], 1
    %s1680 = scalar_lea.sflag [#allocation6], 1
    %1681 = vsyncpa %s1680, 1
    %1682 = vsyncpa [#allocation9], 1
    %s1683 = scalar_lea.sflag [#allocation9], 1
    %1684 = vsyncpa %s1683, 1
    %1685 = vsyncpa [#allocation12], 1
    %1686 = vsyncpa [#allocation4], 1
    %s1687 = scalar_lea.sflag [#allocation4], 1
    %1688 = vsyncpa %s1687, 1

</llo_original>
